<compile_context>
chip_gen: v7x
topology: tpu7x:2x2x1
jax: 0.10.0
libtpu: 0.0.40
codegen_flags: <defaults>
</compile_context>

<pallas_src>
import functools

import jax
import jax.numpy as jnp
from jax.experimental import pallas as pl
from jax.experimental.pallas import tpu as pltpu

EPS = 1e-5


def _make_fused_kernel(f_max, TN, Lmax, D, Cpad, class_num):
    """All conv branches (BN folded) + Mish + masked max-pool + FC, fused."""

    def kernel(x_ref, w_ref, b_ref, vlen_ref, fcw_ref, fcb_ref, out_ref):
        # Load the (bf16) input block once and widen to f32 so the per-tap
        # sublane slices / reshapes stay on the well-supported 32-bit path;
        # the MXU operands are re-narrowed to bf16 just before each dot.
        xp = x_ref[...].astype(jnp.float32)                  # [TN, Wp_ext, D]

        # Conv as a sum of f_max shifted matmuls against the branch-concatenated
        # (and BN-folded) weights: [TN*Lmax, D] @ [D, Cpad] each, f32 accumulate.
        acc = jnp.zeros((TN * Lmax, Cpad), jnp.float32)
        for i in range(f_max):                               # static unroll
            xi = xp[:, i:i + Lmax, :].reshape(TN * Lmax, D).astype(jnp.bfloat16)
            acc = acc + jnp.dot(xi, w_ref[i],
                                preferred_element_type=jnp.float32)

        # Folded conv-bias + BatchNorm(eval) offset.
        y = acc.reshape(TN, Lmax, Cpad) + b_ref[...]         # [TN, Lmax, Cpad]

        # Mish: y * tanh(softplus(y)), numerically stable, single exp + vrcp.
        #   u = exp(-|y|);  tanh(softplus(y)) = num/den with
        #   y >= 0: num = 1 + 2u,        den = 2u^2 + 2u + 1
        #   y <  0: num = u^2 + 2u,      den = u^2 + 2u + 2
        u = jnp.exp(-jnp.abs(y))
        pos = y >= 0.0
        num = jnp.where(pos, 1.0 + 2.0 * u, u * (u + 2.0))
        den = jnp.where(pos, 2.0 * u * (u + 1.0) + 1.0, u * (u + 2.0) + 2.0)
        act = y * num * pl.reciprocal(den, approx=True)

        # Mask per-branch invalid sequence positions, then global max-pool.
        l_ids = jax.lax.broadcasted_iota(jnp.int32, (TN, Lmax, Cpad), 1)
        neg = jnp.finfo(jnp.float32).min
        act = jnp.where(l_ids < vlen_ref[...], act, neg)
        pooled = jnp.max(act, axis=1)                        # [TN, Cpad]

        # TODO(synk): nn.Dropout(0.5) is identity at inference; training-mode
        # RNG masking is intentionally not emulated.
        out_ref[...] = (
            jnp.dot(pooled, fcw_ref[...], preferred_element_type=jnp.float32)
            + fcb_ref[...]
        )

    return kernel


def textcnn_bn_forward(x, params, kernel_sizes, kernel_num):
    """x: [N, W, D] float32 (already embedded). Returns logits [N, class_num]."""
    N, W, D = x.shape
    Co = kernel_num
    kernel_sizes = tuple(kernel_sizes)
    f_max, f_min = max(kernel_sizes), min(kernel_sizes)
    Wp = W + 4                        # Conv2d padding=(2, 0) on the seq dim
    Lmax = Wp - f_min + 1             # longest branch output length
    Wp_ext = Wp + (f_max - f_min)     # slack rows so every tap index is in range
    C_total = Co * len(kernel_sizes)
    Cpad = ((C_total + 127) // 128) * 128
    class_num = params["fc_w"].shape[1]

    # ---- Fold BN(eval) + conv bias into the weights; concat branches along Co.
    w_cols, b_cols, v_cols = [], [], []
    for f in kernel_sizes:
        p = params["convs"][f]
        scale = p["bn_gamma"].reshape(Co) * jax.lax.rsqrt(
            p["bn_var"].reshape(Co) + EPS)
        w_f = p["w"] * scale                                           # [f, D, Co]
        b_f = (p["b"].reshape(Co) - p["bn_mean"].reshape(Co)) * scale \
            + p["bn_beta"].reshape(Co)
        w_cols.append(jnp.pad(w_f, ((0, f_max - f), (0, 0), (0, 0))))  # zero taps
        b_cols.append(b_f)
        v_cols.append(jnp.full((Co,), Wp - f + 1, jnp.int32))          # valid L_f
    pad_c = Cpad - C_total
    w_all = jnp.pad(jnp.concatenate(w_cols, axis=2),
                    ((0, 0), (0, 0), (0, pad_c))).astype(jnp.bfloat16)
    b_all = jnp.pad(jnp.concatenate(b_cols), (0, pad_c)).reshape(1, 1, Cpad)
    vlen = jnp.pad(jnp.concatenate(v_cols), (0, pad_c),
                   constant_values=Lmax).reshape(1, 1, Cpad)
    fc_w = jnp.pad(params["fc_w"], ((0, pad_c), (0, 0)))               # zero rows
    fc_b = params["fc_b"].reshape(1, class_num)

    # ---- Halo pad + bf16 cast of x in a single fused XLA pass (one HBM pass).
    x_p = jnp.pad(x, ((0, 0), (2, 2 + f_max - f_min), (0, 0))).astype(jnp.bfloat16)

    # ---- Batch tile (divides N; multiple of 8 when blocked, else whole batch).
    TN = N
    for cand in (32, 16, 8):
        if N % cand == 0:
            TN = cand
            break
    grid = (N // TN,)

    kernel = _make_fused_kernel(f_max, TN, Lmax, D, Cpad, class_num)
    return pl.pallas_call(
        kernel,
        out_shape=jax.ShapeDtypeStruct((N, class_num), jnp.float32),
        grid=grid,
        in_specs=[
            pl.BlockSpec((TN, Wp_ext, D), lambda b: (b, 0, 0)),     # x (bf16)
            pl.BlockSpec((f_max, D, Cpad), lambda b: (0, 0, 0)),    # fused conv w
            pl.BlockSpec((1, 1, Cpad), lambda b: (0, 0, 0)),        # folded bias
            pl.BlockSpec((1, 1, Cpad), lambda b: (0, 0, 0)),        # valid lengths
            pl.BlockSpec((Cpad, class_num), lambda b: (0, 0)),      # fc weight
            pl.BlockSpec((1, class_num), lambda b: (0, 0)),         # fc bias
        ],
        out_specs=pl.BlockSpec((TN, class_num), lambda b: (b, 0)),
        compiler_params=pltpu.CompilerParams(
            dimension_semantics=("parallel",),
            vmem_limit_bytes=32 * 1024 * 1024,
        ),
    )(x_p, w_all, b_all, vlen, fc_w, fc_b)


def init_params(key, embed_dim, class_num, kernel_num, kernel_sizes):
    """Module-faithful parameters (per-branch conv w/b + BN stats + FC)."""
    Co = kernel_num
    params = {"convs": {}}
    for f in kernel_sizes:
        key, k1, k2, k3, k4, k5, k6 = jax.random.split(key, 7)
        params["convs"][f] = {
            "w": 0.1 * jax.random.normal(k1, (f, embed_dim, Co), jnp.float32),
            "b": 0.1 * jax.random.normal(k2, (1, 1, Co), jnp.float32),
            "bn_gamma": 1.0 + 0.1 * jax.random.normal(k3, (1, 1, Co), jnp.float32),
            "bn_beta": 0.1 * jax.random.normal(k4, (1, 1, Co), jnp.float32),
            "bn_mean": 0.1 * jax.random.normal(k5, (1, 1, Co), jnp.float32),
            "bn_var": jnp.abs(1.0 + 0.1 * jax.random.normal(k6, (1, 1, Co), jnp.float32)),
        }
    key, k1, k2 = jax.random.split(key, 3)
    fan_in = Co * len(kernel_sizes)
    params["fc_w"] = 0.1 * jax.random.normal(k1, (fan_in, class_num), jnp.float32)
    params["fc_b"] = 0.1 * jax.random.normal(k2, (1, class_num), jnp.float32)
    return params


if __name__ == "__main__":
    # Small shapes consistent with the module's forward:
    # batch=2, seq_len=8, embed_dim=32, kernel_num=16, kernel_sizes=2..7, classes=2
    N, W, D = 2, 8, 32
    kernel_num = 16
    kernel_sizes = list(range(2, 8))
    class_num = 2

    key = jax.random.PRNGKey(0)
    key, kx = jax.random.split(key)
    x = jax.random.normal(kx, (N, W, D), jnp.float32)

    params = init_params(key, D, class_num, kernel_num, kernel_sizes)

    fwd = jax.jit(
        functools.partial(
            textcnn_bn_forward, kernel_sizes=kernel_sizes, kernel_num=kernel_num
        )
    )
    logits = fwd(x, params)
    jax.block_until_ready(logits)
    assert logits.shape == (N, class_num)
    print("KERNEL_OK")
</pallas_src>

<mosaic_0001>
module attributes {stable_mosaic.version = 11 : i64} {
  func.func @kernel(%arg0: i32, %arg1: memref<2x17x32xbf16, #tpu.memory_space<vmem>>, %arg2: memref<7x32x128xbf16, #tpu.memory_space<vmem>>, %arg3: memref<1x1x128xf32, #tpu.memory_space<vmem>>, %arg4: memref<1x1x128xi32, #tpu.memory_space<vmem>>, %arg5: memref<128x2xf32, #tpu.memory_space<vmem>>, %arg6: memref<1x2xf32, #tpu.memory_space<vmem>>, %arg7: memref<2x2xf32, #tpu.memory_space<vmem>>) attributes {dimension_semantics = [#tpu.dimension_semantics<parallel>], iteration_bounds = array<i64: 1>, scalar_prefetch = 0 : i64, scratch_operands = 0 : i64, tpu.core_type = #tpu.core_type<tc>, window_params = [{transform_indices = @transform_0, window_bounds = array<i64: 2, 17, 32>}, {pipeline_mode = #tpu.pipeline_mode<synchronous>, transform_indices = @transform_1, window_bounds = array<i64: 7, 32, 128>}, {pipeline_mode = #tpu.pipeline_mode<synchronous>, transform_indices = @transform_2, window_bounds = array<i64: 1, 1, 128>}, {pipeline_mode = #tpu.pipeline_mode<synchronous>, transform_indices = @transform_3, window_bounds = array<i64: 1, 1, 128>}, {pipeline_mode = #tpu.pipeline_mode<synchronous>, transform_indices = @transform_4, window_bounds = array<i64: 128, 2>}, {pipeline_mode = #tpu.pipeline_mode<synchronous>, transform_indices = @transform_5, window_bounds = array<i64: 1, 2>}, {transform_indices = @transform_6, window_bounds = array<i64: 2, 2>}]} {
    %c0 = arith.constant 0 : index
    %c0_0 = arith.constant 0 : index
    %c0_1 = arith.constant 0 : index
    %0 = vector.load %arg1[%c0, %c0_0, %c0_1] : memref<2x17x32xbf16, #tpu.memory_space<vmem>>, vector<2x17x32xbf16>
    %1 = arith.extf %0 : vector<2x17x32xbf16> to vector<2x17x32xf32>
    %cst = arith.constant 0.000000e+00 : f32
    %2 = vector.broadcast %cst : f32 to vector<22x128xf32>
    %3 = vector.extract_strided_slice %1 {offsets = [0, 0, 0], sizes = [2, 11, 32], strides = [1, 1, 1]} : vector<2x17x32xf32> to vector<2x11x32xf32>
    %4 = vector.shape_cast %3 : vector<2x11x32xf32> to vector<22x32xf32>
    %5 = arith.truncf %4 : vector<22x32xf32> to vector<22x32xbf16>
    %c0_2 = arith.constant 0 : index
    %c0_3 = arith.constant 0 : index
    %c0_4 = arith.constant 0 : index
    %6 = vector.load %arg2[%c0_2, %c0_3, %c0_4] : memref<7x32x128xbf16, #tpu.memory_space<vmem>>, vector<1x32x128xbf16>
    %7 = vector.shape_cast %6 : vector<1x32x128xbf16> to vector<32x128xbf16>
    %cst_5 = arith.constant dense<0.000000e+00> : vector<22x128xf32>
    %8 = tpu.matmul %5, %7, %cst_5 {dimension_numbers = #tpu.dot_dimension_numbers<[1], [0], [0], [1], [0, 0, 1, 1], [], []>} : vector<22x32xbf16>, vector<32x128xbf16>, vector<22x128xf32> -> vector<22x128xf32>
    %9 = arith.addf %2, %8 : vector<22x128xf32>
    %10 = vector.extract_strided_slice %1 {offsets = [0, 1, 0], sizes = [2, 11, 32], strides = [1, 1, 1]} : vector<2x17x32xf32> to vector<2x11x32xf32>
    %11 = vector.shape_cast %10 : vector<2x11x32xf32> to vector<22x32xf32>
    %12 = arith.truncf %11 : vector<22x32xf32> to vector<22x32xbf16>
    %c1 = arith.constant 1 : index
    %c0_6 = arith.constant 0 : index
    %c0_7 = arith.constant 0 : index
    %13 = vector.load %arg2[%c1, %c0_6, %c0_7] : memref<7x32x128xbf16, #tpu.memory_space<vmem>>, vector<1x32x128xbf16>
    %14 = vector.shape_cast %13 : vector<1x32x128xbf16> to vector<32x128xbf16>
    %cst_8 = arith.constant dense<0.000000e+00> : vector<22x128xf32>
    %15 = tpu.matmul %12, %14, %cst_8 {dimension_numbers = #tpu.dot_dimension_numbers<[1], [0], [0], [1], [0, 0, 1, 1], [], []>} : vector<22x32xbf16>, vector<32x128xbf16>, vector<22x128xf32> -> vector<22x128xf32>
    %16 = arith.addf %9, %15 : vector<22x128xf32>
    %17 = vector.extract_strided_slice %1 {offsets = [0, 2, 0], sizes = [2, 11, 32], strides = [1, 1, 1]} : vector<2x17x32xf32> to vector<2x11x32xf32>
    %18 = vector.shape_cast %17 : vector<2x11x32xf32> to vector<22x32xf32>
    %19 = arith.truncf %18 : vector<22x32xf32> to vector<22x32xbf16>
    %c2 = arith.constant 2 : index
    %c0_9 = arith.constant 0 : index
    %c0_10 = arith.constant 0 : index
    %20 = vector.load %arg2[%c2, %c0_9, %c0_10] : memref<7x32x128xbf16, #tpu.memory_space<vmem>>, vector<1x32x128xbf16>
    %21 = vector.shape_cast %20 : vector<1x32x128xbf16> to vector<32x128xbf16>
    %cst_11 = arith.constant dense<0.000000e+00> : vector<22x128xf32>
    %22 = tpu.matmul %19, %21, %cst_11 {dimension_numbers = #tpu.dot_dimension_numbers<[1], [0], [0], [1], [0, 0, 1, 1], [], []>} : vector<22x32xbf16>, vector<32x128xbf16>, vector<22x128xf32> -> vector<22x128xf32>
    %23 = arith.addf %16, %22 : vector<22x128xf32>
    %24 = vector.extract_strided_slice %1 {offsets = [0, 3, 0], sizes = [2, 11, 32], strides = [1, 1, 1]} : vector<2x17x32xf32> to vector<2x11x32xf32>
    %25 = vector.shape_cast %24 : vector<2x11x32xf32> to vector<22x32xf32>
    %26 = arith.truncf %25 : vector<22x32xf32> to vector<22x32xbf16>
    %c3 = arith.constant 3 : index
    %c0_12 = arith.constant 0 : index
    %c0_13 = arith.constant 0 : index
    %27 = vector.load %arg2[%c3, %c0_12, %c0_13] : memref<7x32x128xbf16, #tpu.memory_space<vmem>>, vector<1x32x128xbf16>
    %28 = vector.shape_cast %27 : vector<1x32x128xbf16> to vector<32x128xbf16>
    %cst_14 = arith.constant dense<0.000000e+00> : vector<22x128xf32>
    %29 = tpu.matmul %26, %28, %cst_14 {dimension_numbers = #tpu.dot_dimension_numbers<[1], [0], [0], [1], [0, 0, 1, 1], [], []>} : vector<22x32xbf16>, vector<32x128xbf16>, vector<22x128xf32> -> vector<22x128xf32>
    %30 = arith.addf %23, %29 : vector<22x128xf32>
    %31 = vector.extract_strided_slice %1 {offsets = [0, 4, 0], sizes = [2, 11, 32], strides = [1, 1, 1]} : vector<2x17x32xf32> to vector<2x11x32xf32>
    %32 = vector.shape_cast %31 : vector<2x11x32xf32> to vector<22x32xf32>
    %33 = arith.truncf %32 : vector<22x32xf32> to vector<22x32xbf16>
    %c4 = arith.constant 4 : index
    %c0_15 = arith.constant 0 : index
    %c0_16 = arith.constant 0 : index
    %34 = vector.load %arg2[%c4, %c0_15, %c0_16] : memref<7x32x128xbf16, #tpu.memory_space<vmem>>, vector<1x32x128xbf16>
    %35 = vector.shape_cast %34 : vector<1x32x128xbf16> to vector<32x128xbf16>
    %cst_17 = arith.constant dense<0.000000e+00> : vector<22x128xf32>
    %36 = tpu.matmul %33, %35, %cst_17 {dimension_numbers = #tpu.dot_dimension_numbers<[1], [0], [0], [1], [0, 0, 1, 1], [], []>} : vector<22x32xbf16>, vector<32x128xbf16>, vector<22x128xf32> -> vector<22x128xf32>
    %37 = arith.addf %30, %36 : vector<22x128xf32>
    %38 = vector.extract_strided_slice %1 {offsets = [0, 5, 0], sizes = [2, 11, 32], strides = [1, 1, 1]} : vector<2x17x32xf32> to vector<2x11x32xf32>
    %39 = vector.shape_cast %38 : vector<2x11x32xf32> to vector<22x32xf32>
    %40 = arith.truncf %39 : vector<22x32xf32> to vector<22x32xbf16>
    %c5 = arith.constant 5 : index
    %c0_18 = arith.constant 0 : index
    %c0_19 = arith.constant 0 : index
    %41 = vector.load %arg2[%c5, %c0_18, %c0_19] : memref<7x32x128xbf16, #tpu.memory_space<vmem>>, vector<1x32x128xbf16>
    %42 = vector.shape_cast %41 : vector<1x32x128xbf16> to vector<32x128xbf16>
    %cst_20 = arith.constant dense<0.000000e+00> : vector<22x128xf32>
    %43 = tpu.matmul %40, %42, %cst_20 {dimension_numbers = #tpu.dot_dimension_numbers<[1], [0], [0], [1], [0, 0, 1, 1], [], []>} : vector<22x32xbf16>, vector<32x128xbf16>, vector<22x128xf32> -> vector<22x128xf32>
    %44 = arith.addf %37, %43 : vector<22x128xf32>
    %45 = vector.extract_strided_slice %1 {offsets = [0, 6, 0], sizes = [2, 11, 32], strides = [1, 1, 1]} : vector<2x17x32xf32> to vector<2x11x32xf32>
    %46 = vector.shape_cast %45 : vector<2x11x32xf32> to vector<22x32xf32>
    %47 = arith.truncf %46 : vector<22x32xf32> to vector<22x32xbf16>
    %c6 = arith.constant 6 : index
    %c0_21 = arith.constant 0 : index
    %c0_22 = arith.constant 0 : index
    %48 = vector.load %arg2[%c6, %c0_21, %c0_22] : memref<7x32x128xbf16, #tpu.memory_space<vmem>>, vector<1x32x128xbf16>
    %49 = vector.shape_cast %48 : vector<1x32x128xbf16> to vector<32x128xbf16>
    %cst_23 = arith.constant dense<0.000000e+00> : vector<22x128xf32>
    %50 = tpu.matmul %47, %49, %cst_23 {dimension_numbers = #tpu.dot_dimension_numbers<[1], [0], [0], [1], [0, 0, 1, 1], [], []>} : vector<22x32xbf16>, vector<32x128xbf16>, vector<22x128xf32> -> vector<22x128xf32>
    %51 = arith.addf %44, %50 : vector<22x128xf32>
    %52 = vector.shape_cast %51 : vector<22x128xf32> to vector<2x11x128xf32>
    %c0_24 = arith.constant 0 : index
    %c0_25 = arith.constant 0 : index
    %c0_26 = arith.constant 0 : index
    %53 = vector.load %arg3[%c0_24, %c0_25, %c0_26] : memref<1x1x128xf32, #tpu.memory_space<vmem>>, vector<1x1x128xf32>
    %54 = vector.broadcast %53 : vector<1x1x128xf32> to vector<2x11x128xf32>
    %55 = arith.addf %52, %54 : vector<2x11x128xf32>
    %56 = math.absf %55 : vector<2x11x128xf32>
    %cst_27 = arith.constant 0.000000e+00 : f32
    %57 = vector.broadcast %cst_27 : f32 to vector<2x11x128xf32>
    %58 = arith.subf %57, %56 : vector<2x11x128xf32>
    %59 = math.exp %58 : vector<2x11x128xf32>
    %cst_28 = arith.constant 0.000000e+00 : f32
    %60 = vector.broadcast %cst_28 : f32 to vector<2x11x128xf32>
    %61 = arith.cmpf oge, %55, %60 : vector<2x11x128xf32>
    %cst_29 = arith.constant 2.000000e+00 : f32
    %62 = vector.broadcast %cst_29 : f32 to vector<2x11x128xf32>
    %63 = arith.mulf %62, %59 : vector<2x11x128xf32>
    %cst_30 = arith.constant 1.000000e+00 : f32
    %64 = vector.broadcast %cst_30 : f32 to vector<2x11x128xf32>
    %65 = arith.addf %64, %63 : vector<2x11x128xf32>
    %cst_31 = arith.constant 2.000000e+00 : f32
    %66 = vector.broadcast %cst_31 : f32 to vector<2x11x128xf32>
    %67 = arith.addf %59, %66 : vector<2x11x128xf32>
    %68 = arith.mulf %59, %67 : vector<2x11x128xf32>
    %69 = arith.select %61, %65, %68 : vector<2x11x128xi1>, vector<2x11x128xf32>
    %cst_32 = arith.constant 2.000000e+00 : f32
    %70 = vector.broadcast %cst_32 : f32 to vector<2x11x128xf32>
    %71 = arith.mulf %70, %59 : vector<2x11x128xf32>
    %cst_33 = arith.constant 1.000000e+00 : f32
    %72 = vector.broadcast %cst_33 : f32 to vector<2x11x128xf32>
    %73 = arith.addf %59, %72 : vector<2x11x128xf32>
    %74 = arith.mulf %71, %73 : vector<2x11x128xf32>
    %cst_34 = arith.constant 1.000000e+00 : f32
    %75 = vector.broadcast %cst_34 : f32 to vector<2x11x128xf32>
    %76 = arith.addf %74, %75 : vector<2x11x128xf32>
    %cst_35 = arith.constant 2.000000e+00 : f32
    %77 = vector.broadcast %cst_35 : f32 to vector<2x11x128xf32>
    %78 = arith.addf %59, %77 : vector<2x11x128xf32>
    %79 = arith.mulf %59, %78 : vector<2x11x128xf32>
    %cst_36 = arith.constant 2.000000e+00 : f32
    %80 = vector.broadcast %cst_36 : f32 to vector<2x11x128xf32>
    %81 = arith.addf %79, %80 : vector<2x11x128xf32>
    %82 = arith.select %61, %76, %81 : vector<2x11x128xi1>, vector<2x11x128xf32>
    %83 = arith.mulf %55, %69 : vector<2x11x128xf32>
    %84 = tpu.reciprocal %82 {approx = true} : vector<2x11x128xf32> -> vector<2x11x128xf32>
    %85 = arith.mulf %83, %84 : vector<2x11x128xf32>
    %86 = tpu.iota {dimensions = array<i32: 1>} : vector<2x11x128xi32>
    %c0_37 = arith.constant 0 : index
    %c0_38 = arith.constant 0 : index
    %c0_39 = arith.constant 0 : index
    %87 = vector.load %arg4[%c0_37, %c0_38, %c0_39] : memref<1x1x128xi32, #tpu.memory_space<vmem>>, vector<1x1x128xi32>
    %88 = vector.broadcast %87 : vector<1x1x128xi32> to vector<2x11x128xi32>
    %89 = arith.cmpi slt, %86, %88 : vector<2x11x128xi32>
    %cst_40 = arith.constant -3.40282347E+38 : f32
    %90 = vector.broadcast %cst_40 : f32 to vector<2x11x128xf32>
    %91 = arith.select %89, %85, %90 : vector<2x11x128xi1>, vector<2x11x128xf32>
    %cst_41 = arith.constant dense<0xFF800000> : vector<2x128xf32>
    %92 = vector.multi_reduction <maximumf>, %91, %cst_41 [1] : vector<2x11x128xf32> to vector<2x128xf32>
    %c0_42 = arith.constant 0 : index
    %c0_43 = arith.constant 0 : index
    %93 = vector.load %arg5[%c0_42, %c0_43] : memref<128x2xf32, #tpu.memory_space<vmem>>, vector<128x2xf32>
    %cst_44 = arith.constant dense<0.000000e+00> : vector<2x2xf32>
    %94 = tpu.matmul %92, %93, %cst_44 {dimension_numbers = #tpu.dot_dimension_numbers<[1], [0], [0], [1], [0, 0, 1, 1], [], []>} : vector<2x128xf32>, vector<128x2xf32>, vector<2x2xf32> -> vector<2x2xf32>
    %c0_45 = arith.constant 0 : index
    %c0_46 = arith.constant 0 : index
    %95 = vector.load %arg6[%c0_45, %c0_46] : memref<1x2xf32, #tpu.memory_space<vmem>>, vector<1x2xf32>
    %96 = vector.broadcast %95 : vector<1x2xf32> to vector<2x2xf32>
    %97 = arith.addf %94, %96 : vector<2x2xf32>
    %c0_47 = arith.constant 0 : index
    %c0_48 = arith.constant 0 : index
    %98 = vector.load %arg7[%c0_47, %c0_48] : memref<2x2xf32, #tpu.memory_space<vmem>>, vector<2x2xf32>
    tpu.vector_store %arg7[%c0_47, %c0_48], %97 {strides = array<i32>} : memref<2x2xf32, #tpu.memory_space<vmem>>, vector<2x2xf32>,
    return
  }
  func.func @transform_0(%arg0: i32) -> (i32, i32, i32) {
    %c0_i32 = arith.constant 0 : i32
    %c0_i32_0 = arith.constant 0 : i32
    %c0_i32_1 = arith.constant 0 : i32
    return %arg0, %c0_i32, %c0_i32_0 : i32, i32, i32
  }
  func.func @transform_1(%arg0: i32) -> (i32, i32, i32) {
    %c0_i32 = arith.constant 0 : i32
    %c0_i32_0 = arith.constant 0 : i32
    %c0_i32_1 = arith.constant 0 : i32
    %c0_i32_2 = arith.constant 0 : i32
    return %c0_i32, %c0_i32_0, %c0_i32_1 : i32, i32, i32
  }
  func.func @transform_2(%arg0: i32) -> (i32, i32, i32) {
    %c0_i32 = arith.constant 0 : i32
    %c0_i32_0 = arith.constant 0 : i32
    %c0_i32_1 = arith.constant 0 : i32
    %c0_i32_2 = arith.constant 0 : i32
    return %c0_i32, %c0_i32_0, %c0_i32_1 : i32, i32, i32
  }
  func.func @transform_3(%arg0: i32) -> (i32, i32, i32) {
    %c0_i32 = arith.constant 0 : i32
    %c0_i32_0 = arith.constant 0 : i32
    %c0_i32_1 = arith.constant 0 : i32
    %c0_i32_2 = arith.constant 0 : i32
    return %c0_i32, %c0_i32_0, %c0_i32_1 : i32, i32, i32
  }
  func.func @transform_4(%arg0: i32) -> (i32, i32) {
    %c0_i32 = arith.constant 0 : i32
    %c0_i32_0 = arith.constant 0 : i32
    %c0_i32_1 = arith.constant 0 : i32
    return %c0_i32, %c0_i32_0 : i32, i32
  }
  func.func @transform_5(%arg0: i32) -> (i32, i32) {
    %c0_i32 = arith.constant 0 : i32
    %c0_i32_0 = arith.constant 0 : i32
    %c0_i32_1 = arith.constant 0 : i32
    return %c0_i32, %c0_i32_0 : i32, i32
  }
  func.func @transform_6(%arg0: i32) -> (i32, i32) {
    %c0_i32 = arith.constant 0 : i32
    %c0_i32_0 = arith.constant 0 : i32
    return %arg0, %c0_i32 : i32, i32
  }
}

</mosaic_0001>

<llo_original>
// kernel: textcnn_bn_forward.1
$region0: #{textcnn_bn_forward.1}
  #allocation0 [shape = 'u32[]', space=smem, size = 0x4, offset = 0x4, fixed_abs, tag = 'smem constant byte address 0x4 - core index']
  #allocation1 [shape = 'u32[144,128]{1,0:T(1,128)}', space=vmem, size = 0x12000, scoped, tag = 'internal scratch']
  %s0 = inlined_call_operand.vmem [shape: bf16[2,17,32], index: 0, kind: input, shape index: {}]
  %s1 = inlined_call_operand.vmem [shape: bf16[7,32,128], index: 1, kind: input, shape index: {}]
  %s2 = inlined_call_operand.vmem [shape: f32[1,1,128], index: 2, kind: input, shape index: {}]
  %s3 = inlined_call_operand.vmem [shape: s32[1,1,128], index: 3, kind: input, shape index: {}]
  %s4 = inlined_call_operand.vmem [shape: f32[128,2], index: 4, kind: input, shape index: {}]
  %s5 = inlined_call_operand.vmem [shape: f32[1,2], index: 5, kind: input, shape index: {}]
  %s6 = inlined_call_operand.hbm [shape: f32[2,2], index: 6, kind: output, shape index: {}]
  %s7 = sld [smem:[#allocation0]]
  $region34: #{textcnn_bn_forward.1} parent=0
    _
  %s9 = ssub.s32 1, %s7
  %s10 = scalar_select 0, %s9, %s7
  $region1: #{textcnn_bn_forward.1} parent=0
    #allocation2 [shape = 'u8[1024]{0}', space=vmem, size = 0x400, scoped, tag = 'output window, operand 0, single buffered']
    #allocation3 [shape = 's32[1]{0}', space=sflag, size = 0x4, scoped, tag = 'scoped memory for textcnn_bn_forward.1']
    %11 = vsyncpa [#allocation3], 0
    // Predicated region
    $region2: #{textcnn_bn_forward.1} parent=1 // pred_check
      _
    $region3: #{textcnn_bn_forward.1} parent=1 // pred_check_branch
      %13 = sbr.rel (0) target = $region5
    $region4: #{textcnn_bn_forward.1} parent=1 // pred_region
      _
    $region5: #{textcnn_bn_forward.1} parent=1 // pred_fallthru
      _
    // Predicated region
    $region6: #{textcnn_bn_forward.1} parent=1 // pred_check
      _
    $region7: #{textcnn_bn_forward.1} parent=1 // pred_check_branch
      %15 = sbr.rel (0) target = $region9
    $region8: #{textcnn_bn_forward.1} parent=1 // pred_region
      _
    $region9: #{textcnn_bn_forward.1} parent=1 // pred_fallthru
      _
    // Predicated region
    $region10: #{textcnn_bn_forward.1} parent=1 // pred_check
      _
    $region11: #{textcnn_bn_forward.1} parent=1 // pred_check_branch
      %17 = sbr.rel (0) target = $region13
    $region12: #{textcnn_bn_forward.1} parent=1 // pred_region
      _
    $region13: #{textcnn_bn_forward.1} parent=1 // pred_fallthru
      _
    // Predicated region
    $region14: #{textcnn_bn_forward.1} parent=1 // pred_check
      _
    $region15: #{textcnn_bn_forward.1} parent=1 // pred_check_branch
      %19 = sbr.rel (0) target = $region17
    $region16: #{textcnn_bn_forward.1} parent=1 // pred_region
      _
    $region17: #{textcnn_bn_forward.1} parent=1 // pred_fallthru
      _
    // Predicated region
    $region18: #{textcnn_bn_forward.1} parent=1 // pred_check
      _
    $region19: #{textcnn_bn_forward.1} parent=1 // pred_check_branch
      %21 = sbr.rel (0) target = $region21
    $region20: #{textcnn_bn_forward.1} parent=1 // pred_region
      _
    $region21: #{textcnn_bn_forward.1} parent=1 // pred_fallthru
      _
    // Predicated region
    $region22: #{textcnn_bn_forward.1} parent=1 // pred_check
      _
    $region23: #{textcnn_bn_forward.1} parent=1 // pred_check_branch
      %23 = sbr.rel (0) target = $region25
    $region24: #{textcnn_bn_forward.1} parent=1 // pred_region
      _
    $region25: #{textcnn_bn_forward.1} parent=1 // pred_fallthru
      _
    %v25 = vld [vmem:[%s0] sm:$0xf]
    %v26 = vld [vmem:[%s0 + $0x4] sm:$0xf]
    %v27 = vld [vmem:[%s0 + $0x8] sm:$0x1]
    %v28 = vld [vmem:[%s0 + $0xc] sm:$0xf]
    %v29 = vld [vmem:[%s0 + $0x10] sm:$0xf]
    %v30 = vld [vmem:[%s0 + $0x14] sm:$0x1]
    %v31 = vunpack.c.l.bf16 %v25
    %v32 = vunpack.c.l.bf16 %v26
    %v33 = vunpack.c.l.bf16 %v27
    %v34 = vunpack.c.l.bf16 %v28
    %v35 = vunpack.c.l.bf16 %v29
    %v36 = vunpack.c.l.bf16 %v30
    %v41 = vcombine.high %v31, %v31
    %v43 = vunpack.c.l.s4 1966171168
    %v44 = vunpack.c.0.s8 %v43
    %v45 = vlaneseq
    %v46 = vshrl.u32 %v45, 7
    %v47 = vsub.s32 %v44, %v46
    %v48 = vrot.slane %v31, %v47
    %v50 = vunpack.c.l.s4 1966171168
    %v51 = vunpack.c.0.s8 %v50
    %v52 = vlaneseq
    %v53 = vshrl.u32 %v52, 7
    %v54 = vsub.s32 %v51, %v53
    %v55 = vrot.slane %v41, %v54
    %v56 = vcombine.high %v48, %v48
    %v57 = vcombine.high %v55, %v55
    %v59 = vunpack.c.l.s4 1966171168
    %v60 = vunpack.c.0.s8 %v59
    %v61 = vlaneseq
    %v62 = vshrl.u32 %v61, 7
    %v63 = vsub.s32 %v60, %v62
    %v64 = vrot.slane %v48, %v63
    %v66 = vunpack.c.l.s4 1966171168
    %v67 = vunpack.c.0.s8 %v66
    %v68 = vlaneseq
    %v69 = vshrl.u32 %v68, 7
    %v70 = vsub.s32 %v67, %v69
    %v71 = vrot.slane %v55, %v70
    %v73 = vunpack.c.l.s4 1966171168
    %v74 = vunpack.c.0.s8 %v73
    %v75 = vlaneseq
    %v76 = vshrl.u32 %v75, 7
    %v77 = vsub.s32 %v74, %v76
    %v78 = vrot.slane %v56, %v77
    %v80 = vunpack.c.l.s4 1966171168
    %v81 = vunpack.c.0.s8 %v80
    %v82 = vlaneseq
    %v83 = vshrl.u32 %v82, 7
    %v84 = vsub.s32 %v81, %v83
    %v85 = vrot.slane %v57, %v84
    %v86 = vcombine.high %v64, %v64
    %v87 = vcombine.high %v71, %v71
    %v88 = vcombine.high %v78, %v78
    %v89 = vcombine.high %v85, %v85
    %v91 = vunpack.c.l.s4 1966171168
    %v92 = vunpack.c.0.s8 %v91
    %v93 = vlaneseq
    %v94 = vshrl.u32 %v93, 7
    %v95 = vsub.s32 %v92, %v94
    %v96 = vrot.slane %v32, %v95
    %v97 = vcombine.high %v96, %v96
    %v99 = vunpack.c.l.s4 1966171168
    %v100 = vunpack.c.0.s8 %v99
    %v101 = vlaneseq
    %v102 = vshrl.u32 %v101, 7
    %v103 = vsub.s32 %v100, %v102
    %v104 = vrot.slane %v96, %v103
    %v106 = vunpack.c.l.s4 1966171168
    %v107 = vunpack.c.0.s8 %v106
    %v108 = vlaneseq
    %v109 = vshrl.u32 %v108, 7
    %v110 = vsub.s32 %v107, %v109
    %v111 = vrot.slane %v97, %v110
    %v112 = vcombine.high %v104, %v104
    %v113 = vcombine.high %v34, %v34
    %v115 = vunpack.c.l.s4 1966171168
    %v116 = vunpack.c.0.s8 %v115
    %v117 = vlaneseq
    %v118 = vshrl.u32 %v117, 7
    %v119 = vsub.s32 %v116, %v118
    %v120 = vrot.slane %v34, %v119
    %v122 = vunpack.c.l.s4 1966171168
    %v123 = vunpack.c.0.s8 %v122
    %v124 = vlaneseq
    %v125 = vshrl.u32 %v124, 7
    %v126 = vsub.s32 %v123, %v125
    %v127 = vrot.slane %v113, %v126
    %v128 = vcombine.high %v120, %v120
    %v129 = vcombine.high %v127, %v127
    %v131 = vunpack.c.l.s4 1966171168
    %v132 = vunpack.c.0.s8 %v131
    %v133 = vlaneseq
    %v134 = vshrl.u32 %v133, 7
    %v135 = vsub.s32 %v132, %v134
    %v136 = vrot.slane %v120, %v135
    %v138 = vunpack.c.l.s4 1966171168
    %v139 = vunpack.c.0.s8 %v138
    %v140 = vlaneseq
    %v141 = vshrl.u32 %v140, 7
    %v142 = vsub.s32 %v139, %v141
    %v143 = vrot.slane %v127, %v142
    %v145 = vunpack.c.l.s4 1966171168
    %v146 = vunpack.c.0.s8 %v145
    %v147 = vlaneseq
    %v148 = vshrl.u32 %v147, 7
    %v149 = vsub.s32 %v146, %v148
    %v150 = vrot.slane %v128, %v149
    %v152 = vunpack.c.l.s4 1966171168
    %v153 = vunpack.c.0.s8 %v152
    %v154 = vlaneseq
    %v155 = vshrl.u32 %v154, 7
    %v156 = vsub.s32 %v153, %v155
    %v157 = vrot.slane %v129, %v156
    %v158 = vcombine.high %v136, %v136
    %v159 = vcombine.high %v143, %v143
    %v160 = vcombine.high %v150, %v150
    %v161 = vcombine.high %v157, %v157
    %v163 = vunpack.c.l.s4 1966171168
    %v164 = vunpack.c.0.s8 %v163
    %v165 = vlaneseq
    %v166 = vshrl.u32 %v165, 7
    %v167 = vsub.s32 %v164, %v166
    %v168 = vrot.slane %v35, %v167
    %v169 = vcombine.high %v168, %v168
    %v171 = vunpack.c.l.s4 1966171168
    %v172 = vunpack.c.0.s8 %v171
    %v173 = vlaneseq
    %v174 = vshrl.u32 %v173, 7
    %v175 = vsub.s32 %v172, %v174
    %v176 = vrot.slane %v168, %v175
    %v178 = vunpack.c.l.s4 1966171168
    %v179 = vunpack.c.0.s8 %v178
    %v180 = vlaneseq
    %v181 = vshrl.u32 %v180, 7
    %v182 = vsub.s32 %v179, %v181
    %v183 = vrot.slane %v169, %v182
    %v184 = vcombine.high %v176, %v176
    %v185 = vcombine.low %v64, %v78
    %v186 = vcombine.low %v86, %v88
    %v187 = vcombine.low %v71, %v85
    %v188 = vcombine.low %v87, %v89
    %v190 = vunpack.c.l.s4 1966171168
    %v191 = vunpack.c.0.s8 %v190
    %v192 = vlaneseq
    %v193 = vshrl.u32 %v192, 7
    %v194 = vsub.s32 %v191, %v193
    %v195 = vrot.slane %v185, %v194
    %v197 = vunpack.c.l.s4 1966171168
    %v198 = vunpack.c.0.s8 %v197
    %v199 = vlaneseq
    %v200 = vshrl.u32 %v199, 7
    %v201 = vsub.s32 %v198, %v200
    %v202 = vrot.slane %v186, %v201
    %v204 = vunpack.c.l.s4 1966171168
    %v205 = vunpack.c.0.s8 %v204
    %v206 = vlaneseq
    %v207 = vshrl.u32 %v206, 7
    %v208 = vsub.s32 %v205, %v207
    %v209 = vrot.slane %v187, %v208
    %v211 = vunpack.c.l.s4 1966171168
    %v212 = vunpack.c.0.s8 %v211
    %v213 = vlaneseq
    %v214 = vshrl.u32 %v213, 7
    %v215 = vsub.s32 %v212, %v214
    %v216 = vrot.slane %v188, %v215
    %v217 = vcombine.low %v195, %v202
    %v218 = vcombine.low %v209, %v216
    %v220 = vunpack.c.l.s4 1966171168
    %v221 = vunpack.c.0.s8 %v220
    %v222 = vlaneseq
    %v223 = vshrl.u32 %v222, 7
    %v224 = vsub.s32 %v221, %v223
    %v225 = vrot.slane %v217, %v224
    %v227 = vunpack.c.l.s4 1966171168
    %v228 = vunpack.c.0.s8 %v227
    %v229 = vlaneseq
    %v230 = vshrl.u32 %v229, 7
    %v231 = vsub.s32 %v228, %v230
    %v232 = vrot.slane %v218, %v231
    %v233 = vcombine.low %v225, %v232
    %v234 = vcombine.low %v104, %v111
    %v235 = vcombine.low %v112, %v136
    %v236 = vcombine.low %v150, %v158
    %v237 = vcombine.low %v160, %v143
    %v239 = vunpack.c.l.s4 1966171168
    %v240 = vunpack.c.0.s8 %v239
    %v241 = vlaneseq
    %v242 = vshrl.u32 %v241, 7
    %v243 = vsub.s32 %v240, %v242
    %v244 = vrot.slane %v234, %v243
    %v246 = vunpack.c.l.s4 1966171168
    %v247 = vunpack.c.0.s8 %v246
    %v248 = vlaneseq
    %v249 = vshrl.u32 %v248, 7
    %v250 = vsub.s32 %v247, %v249
    %v251 = vrot.slane %v235, %v250
    %v253 = vunpack.c.l.s4 1966171168
    %v254 = vunpack.c.0.s8 %v253
    %v255 = vlaneseq
    %v256 = vshrl.u32 %v255, 7
    %v257 = vsub.s32 %v254, %v256
    %v258 = vrot.slane %v236, %v257
    %v260 = vunpack.c.l.s4 1966171168
    %v261 = vunpack.c.0.s8 %v260
    %v262 = vlaneseq
    %v263 = vshrl.u32 %v262, 7
    %v264 = vsub.s32 %v261, %v263
    %v265 = vrot.slane %v237, %v264
    %v266 = vcombine.low %v244, %v251
    %v267 = vcombine.low %v258, %v265
    %v269 = vunpack.c.l.s4 1966171168
    %v270 = vunpack.c.0.s8 %v269
    %v271 = vlaneseq
    %v272 = vshrl.u32 %v271, 7
    %v273 = vsub.s32 %v270, %v272
    %v274 = vrot.slane %v266, %v273
    %v276 = vunpack.c.l.s4 1966171168
    %v277 = vunpack.c.0.s8 %v276
    %v278 = vlaneseq
    %v279 = vshrl.u32 %v278, 7
    %v280 = vsub.s32 %v277, %v279
    %v281 = vrot.slane %v267, %v280
    %v282 = vcombine.low %v274, %v281
    %v283 = vcombine.low %v157, %v159
    %v284 = vcombine.low %v161, %v176
    %v285 = vcombine.low %v183, %v184
    %v287 = vunpack.c.l.s4 1966171168
    %v288 = vunpack.c.0.s8 %v287
    %v289 = vlaneseq
    %v290 = vshrl.u32 %v289, 7
    %v291 = vsub.s32 %v288, %v290
    %v292 = vrot.slane %v283, %v291
    %v294 = vunpack.c.l.s4 1966171168
    %v295 = vunpack.c.0.s8 %v294
    %v296 = vlaneseq
    %v297 = vshrl.u32 %v296, 7
    %v298 = vsub.s32 %v295, %v297
    %v299 = vrot.slane %v284, %v298
    %v301 = vunpack.c.l.s4 1966171168
    %v302 = vunpack.c.0.s8 %v301
    %v303 = vlaneseq
    %v304 = vshrl.u32 %v303, 7
    %v305 = vsub.s32 %v302, %v304
    %v306 = vrot.slane %v285, %v305
    %v307 = vcombine.low %v292, %v299
    %v309 = vunpack.c.l.s4 1966171168
    %v310 = vunpack.c.0.s8 %v309
    %v311 = vlaneseq
    %v312 = vshrl.u32 %v311, 7
    %v313 = vsub.s32 %v310, %v312
    %v314 = vrot.slane %v307, %v313
    %v316 = vunpack.c.l.s4 1966171168
    %v317 = vunpack.c.0.s8 %v316
    %v318 = vlaneseq
    %v319 = vshrl.u32 %v318, 7
    %v320 = vsub.s32 %v317, %v319
    %v321 = vrot.slane %v306, %v320
    %v322 = vcombine.low %v314, %v321
    %v326 = vpack.c.bf16 %v282, %v233
    %v327 = vpack.c.bf16 %v322, %v322
    %v328 = vld [vmem:[%s1] sm:$0xf]
    %v329 = vld [vmem:[%s1 + $0x4] sm:$0xf]
    %v330 = vld [vmem:[%s1 + $0x8] sm:$0xf]
    %v331 = vld [vmem:[%s1 + $0xc] sm:$0xf]
    %v332 = vcombine.high %v111, %v111
    %v333 = vcombine.high %v183, %v183
    %v334 = vcombine.low %v78, %v86
    %v335 = vcombine.low %v88, %v71
    %v336 = vcombine.low %v85, %v87
    %v337 = vcombine.low %v89, %v104
    %v339 = vunpack.c.l.s4 1966171168
    %v340 = vunpack.c.0.s8 %v339
    %v341 = vlaneseq
    %v342 = vshrl.u32 %v341, 7
    %v343 = vsub.s32 %v340, %v342
    %v344 = vrot.slane %v334, %v343
    %v346 = vunpack.c.l.s4 1966171168
    %v347 = vunpack.c.0.s8 %v346
    %v348 = vlaneseq
    %v349 = vshrl.u32 %v348, 7
    %v350 = vsub.s32 %v347, %v349
    %v351 = vrot.slane %v335, %v350
    %v353 = vunpack.c.l.s4 1966171168
    %v354 = vunpack.c.0.s8 %v353
    %v355 = vlaneseq
    %v356 = vshrl.u32 %v355, 7
    %v357 = vsub.s32 %v354, %v356
    %v358 = vrot.slane %v336, %v357
    %v360 = vunpack.c.l.s4 1966171168
    %v361 = vunpack.c.0.s8 %v360
    %v362 = vlaneseq
    %v363 = vshrl.u32 %v362, 7
    %v364 = vsub.s32 %v361, %v363
    %v365 = vrot.slane %v337, %v364
    %v366 = vcombine.low %v344, %v351
    %v367 = vcombine.low %v358, %v365
    %v369 = vunpack.c.l.s4 1966171168
    %v370 = vunpack.c.0.s8 %v369
    %v371 = vlaneseq
    %v372 = vshrl.u32 %v371, 7
    %v373 = vsub.s32 %v370, %v372
    %v374 = vrot.slane %v366, %v373
    %v376 = vunpack.c.l.s4 1966171168
    %v377 = vunpack.c.0.s8 %v376
    %v378 = vlaneseq
    %v379 = vshrl.u32 %v378, 7
    %v380 = vsub.s32 %v377, %v379
    %v381 = vrot.slane %v367, %v380
    %v382 = vcombine.low %v374, %v381
    %v383 = vcombine.low %v111, %v112
    %v384 = vcombine.low %v332, %v150
    %v385 = vcombine.low %v158, %v160
    %v386 = vcombine.low %v143, %v157
    %v388 = vunpack.c.l.s4 1966171168
    %v389 = vunpack.c.0.s8 %v388
    %v390 = vlaneseq
    %v391 = vshrl.u32 %v390, 7
    %v392 = vsub.s32 %v389, %v391
    %v393 = vrot.slane %v383, %v392
    %v395 = vunpack.c.l.s4 1966171168
    %v396 = vunpack.c.0.s8 %v395
    %v397 = vlaneseq
    %v398 = vshrl.u32 %v397, 7
    %v399 = vsub.s32 %v396, %v398
    %v400 = vrot.slane %v384, %v399
    %v402 = vunpack.c.l.s4 1966171168
    %v403 = vunpack.c.0.s8 %v402
    %v404 = vlaneseq
    %v405 = vshrl.u32 %v404, 7
    %v406 = vsub.s32 %v403, %v405
    %v407 = vrot.slane %v385, %v406
    %v409 = vunpack.c.l.s4 1966171168
    %v410 = vunpack.c.0.s8 %v409
    %v411 = vlaneseq
    %v412 = vshrl.u32 %v411, 7
    %v413 = vsub.s32 %v410, %v412
    %v414 = vrot.slane %v386, %v413
    %v415 = vcombine.low %v393, %v400
    %v416 = vcombine.low %v407, %v414
    %v418 = vunpack.c.l.s4 1966171168
    %v419 = vunpack.c.0.s8 %v418
    %v420 = vlaneseq
    %v421 = vshrl.u32 %v420, 7
    %v422 = vsub.s32 %v419, %v421
    %v423 = vrot.slane %v415, %v422
    %v425 = vunpack.c.l.s4 1966171168
    %v426 = vunpack.c.0.s8 %v425
    %v427 = vlaneseq
    %v428 = vshrl.u32 %v427, 7
    %v429 = vsub.s32 %v426, %v428
    %v430 = vrot.slane %v416, %v429
    %v431 = vcombine.low %v423, %v430
    %v432 = vcombine.low %v159, %v161
    %v433 = vcombine.low %v176, %v183
    %v434 = vcombine.low %v184, %v333
    %v436 = vunpack.c.l.s4 1966171168
    %v437 = vunpack.c.0.s8 %v436
    %v438 = vlaneseq
    %v439 = vshrl.u32 %v438, 7
    %v440 = vsub.s32 %v437, %v439
    %v441 = vrot.slane %v432, %v440
    %v443 = vunpack.c.l.s4 1966171168
    %v444 = vunpack.c.0.s8 %v443
    %v445 = vlaneseq
    %v446 = vshrl.u32 %v445, 7
    %v447 = vsub.s32 %v444, %v446
    %v448 = vrot.slane %v433, %v447
    %v450 = vunpack.c.l.s4 1966171168
    %v451 = vunpack.c.0.s8 %v450
    %v452 = vlaneseq
    %v453 = vshrl.u32 %v452, 7
    %v454 = vsub.s32 %v451, %v453
    %v455 = vrot.slane %v434, %v454
    %v456 = vcombine.low %v441, %v448
    %v458 = vunpack.c.l.s4 1966171168
    %v459 = vunpack.c.0.s8 %v458
    %v460 = vlaneseq
    %v461 = vshrl.u32 %v460, 7
    %v462 = vsub.s32 %v459, %v461
    %v463 = vrot.slane %v456, %v462
    %v465 = vunpack.c.l.s4 1966171168
    %v466 = vunpack.c.0.s8 %v465
    %v467 = vlaneseq
    %v468 = vshrl.u32 %v467, 7
    %v469 = vsub.s32 %v466, %v468
    %v470 = vrot.slane %v455, %v469
    %v471 = vcombine.low %v463, %v470
    %v475 = vpack.c.bf16 %v431, %v382
    %v476 = vpack.c.bf16 %v471, %v471
    %s477 = scalar_lea.vmem %s1, 16
    %v478 = vld [vmem:[%s477] sm:$0xf]
    %v479 = vld [vmem:[%s477 + $0x4] sm:$0xf]
    %v480 = vld [vmem:[%s477 + $0x8] sm:$0xf]
    %v481 = vld [vmem:[%s477 + $0xc] sm:$0xf]
    %v486 = vunpack.c.l.b16 %v478
    %v487 = vunpack.c.l.b16 %v479
    %v488 = vunpack.c.l.b16 %v480
    %v489 = vunpack.c.l.b16 %v481
    %v490 = vpack.c.b16 %v487, %v486
    %v491 = vpack.c.b16 %v489, %v488
    %vm494 = vcmask 261120
    %v496 = vsel %vm494, %v475, 0
    %v499 = vsel %vm494, %v476, 0
    %501 = vmatprep.subr.bf16.mxu0 0
    %502 = vmatpush1.bf16.msra.mxu0 %v490
    %503 = vmatprep.subr.bf16.mxu0 0
    %504 = vmatpush1.bf16.msra.mxu0 %v491
    %505 = vmatprep.subr.bf16.mxu0 0
    %506 = vmatpush1.bf16.msra.mxu0 0
    %507 = vmatprep.subr.bf16.mxu0 0
    %508 = vmatpush1.bf16.msra.mxu0 0
    %509 = vmatprep.subr.bf16.mxu0 0
    %510 = vmatpush1.bf16.msra.mxu0 0
    %511 = vmatprep.subr.bf16.mxu0 0
    %512 = vmatpush1.bf16.msra.mxu0 0
    %513 = vmatprep.subr.bf16.mxu0 0
    %514 = vmatpush1.bf16.msra.mxu0 0
    %515 = vmatprep.subr.bf16.mxu0 0
    %516 = vmatpush1.bf16.msra.mxu0 0
    %517 = vmatprep.subr.bf16.mxu0 0
    %518 = vmatpush1.bf16.msra.mxu0 0
    %519 = vmatprep.subr.bf16.mxu0 0
    %520 = vmatpush1.bf16.msra.mxu0 0
    %521 = vmatprep.subr.bf16.mxu0 0
    %522 = vmatpush1.bf16.msra.mxu0 0
    %523 = vmatprep.subr.bf16.mxu0 0
    %524 = vmatpush1.bf16.msra.mxu0 0
    %525 = vmatprep.subr.bf16.mxu0 0
    %526 = vmatpush1.bf16.msra.mxu0 0
    %527 = vmatprep.subr.bf16.mxu0 0
    %528 = vmatpush1.bf16.msra.mxu0 0
    %529 = vmatprep.subr.bf16.mxu0 0
    %530 = vmatpush1.bf16.msra.mxu0 0
    %531 = vmatprep.subr.bf16.mxu0 0
    %532 = vmatpush1.bf16.msra.mxu0 0
    %533 = vmatprep.mubr.bf16.mxu0 0
    %534 = vmatmul.mubr.bf16.gmra.mrb[0].mxu0 %v496
    %v535 = vpop.f32.mrb[0].mxu0
    %v536 = vadd.f32 0.0, %v535
    %v537 = vpop.f32.mrb[0].mxu0
    %v538 = vpop.f32.mrb[0].mxu0
    %v539 = vadd.f32 0.0, %v538
    %v540 = vpop.f32.mrb[0].mxu0
    %541 = vmatprep.mubr.bf16.mxu0 0
    %542 = vmatmul.mubr.bf16.gmra.mrb[0].mxu0 %v499
    %v543 = vpop.f32.mrb[0].mxu0
    %v544 = vadd.f32 0.0, %v543
    %v545 = vpop.f32.mrb[0].mxu0
    %v546 = vpop.f32.mrb[0].mxu0
    %v547 = vpop.f32.mrb[0].mxu0
    %548 = vdwg.mxu0
    %v553 = vunpack.c.l.b16 %v328
    %v554 = vunpack.c.l.b16 %v329
    %v555 = vunpack.c.l.b16 %v330
    %v556 = vunpack.c.l.b16 %v331
    %v557 = vpack.c.b16 %v554, %v553
    %v558 = vpack.c.b16 %v556, %v555
    %v562 = vsel %vm494, %v326, 0
    %v565 = vsel %vm494, %v327, 0
    %567 = vmatprep.subr.bf16.mxu0 0
    %568 = vmatpush1.bf16.msra.mxu0 %v557
    %569 = vmatprep.subr.bf16.mxu0 0
    %570 = vmatpush1.bf16.msra.mxu0 %v558
    %571 = vmatprep.subr.bf16.mxu0 0
    %572 = vmatpush1.bf16.msra.mxu0 0
    %573 = vmatprep.subr.bf16.mxu0 0
    %574 = vmatpush1.bf16.msra.mxu0 0
    %575 = vmatprep.subr.bf16.mxu0 0
    %576 = vmatpush1.bf16.msra.mxu0 0
    %577 = vmatprep.subr.bf16.mxu0 0
    %578 = vmatpush1.bf16.msra.mxu0 0
    %579 = vmatprep.subr.bf16.mxu0 0
    %580 = vmatpush1.bf16.msra.mxu0 0
    %581 = vmatprep.subr.bf16.mxu0 0
    %582 = vmatpush1.bf16.msra.mxu0 0
    %583 = vmatprep.subr.bf16.mxu0 0
    %584 = vmatpush1.bf16.msra.mxu0 0
    %585 = vmatprep.subr.bf16.mxu0 0
    %586 = vmatpush1.bf16.msra.mxu0 0
    %587 = vmatprep.subr.bf16.mxu0 0
    %588 = vmatpush1.bf16.msra.mxu0 0
    %589 = vmatprep.subr.bf16.mxu0 0
    %590 = vmatpush1.bf16.msra.mxu0 0
    %591 = vmatprep.subr.bf16.mxu0 0
    %592 = vmatpush1.bf16.msra.mxu0 0
    %593 = vmatprep.subr.bf16.mxu0 0
    %594 = vmatpush1.bf16.msra.mxu0 0
    %595 = vmatprep.subr.bf16.mxu0 0
    %596 = vmatpush1.bf16.msra.mxu0 0
    %597 = vmatprep.subr.bf16.mxu0 0
    %598 = vmatpush1.bf16.msra.mxu0 0
    %599 = vmatprep.mubr.bf16.mxu0 0
    %600 = vmatmul.mubr.bf16.gmra.mrb[0].mxu0 %v562
    %v601 = vpop.f32.mrb[0].mxu0
    %v602 = vadd.f32 %v536, %v601
    %v603 = vpop.f32.mrb[0].mxu0
    %v604 = vpop.f32.mrb[0].mxu0
    %v605 = vadd.f32 %v539, %v604
    %v606 = vpop.f32.mrb[0].mxu0
    %607 = vmatprep.mubr.bf16.mxu0 0
    %608 = vmatmul.mubr.bf16.gmra.mrb[0].mxu0 %v565
    %v609 = vpop.f32.mrb[0].mxu0
    %v610 = vadd.f32 %v544, %v609
    %v611 = vpop.f32.mrb[0].mxu0
    %v612 = vpop.f32.mrb[0].mxu0
    %v613 = vpop.f32.mrb[0].mxu0
    %614 = vdwg.mxu0
    %v615 = vcombine.high %v32, %v32
    %v617 = vunpack.c.l.s4 1966171168
    %v618 = vunpack.c.0.s8 %v617
    %v619 = vlaneseq
    %v620 = vshrl.u32 %v619, 7
    %v621 = vsub.s32 %v618, %v620
    %v622 = vrot.slane %v615, %v621
    %v624 = vunpack.c.l.s4 1966171168
    %v625 = vunpack.c.0.s8 %v624
    %v626 = vlaneseq
    %v627 = vshrl.u32 %v626, 7
    %v628 = vsub.s32 %v625, %v627
    %v629 = vrot.slane %v622, %v628
    %v630 = vcombine.high %v35, %v35
    %v632 = vunpack.c.l.s4 1966171168
    %v633 = vunpack.c.0.s8 %v632
    %v634 = vlaneseq
    %v635 = vshrl.u32 %v634, 7
    %v636 = vsub.s32 %v633, %v635
    %v637 = vrot.slane %v630, %v636
    %v639 = vunpack.c.l.s4 1966171168
    %v640 = vunpack.c.0.s8 %v639
    %v641 = vlaneseq
    %v642 = vshrl.u32 %v641, 7
    %v643 = vsub.s32 %v640, %v642
    %v644 = vrot.slane %v637, %v643
    %v645 = vcombine.low %v202, %v209
    %v646 = vcombine.low %v216, %v244
    %v648 = vunpack.c.l.s4 1966171168
    %v649 = vunpack.c.0.s8 %v648
    %v650 = vlaneseq
    %v651 = vshrl.u32 %v650, 7
    %v652 = vsub.s32 %v649, %v651
    %v653 = vrot.slane %v645, %v652
    %v655 = vunpack.c.l.s4 1966171168
    %v656 = vunpack.c.0.s8 %v655
    %v657 = vlaneseq
    %v658 = vshrl.u32 %v657, 7
    %v659 = vsub.s32 %v656, %v658
    %v660 = vrot.slane %v646, %v659
    %v661 = vcombine.low %v653, %v660
    %v662 = vcombine.low %v112, %v332
    %v663 = vcombine.low %v629, %v158
    %v665 = vunpack.c.l.s4 1966171168
    %v666 = vunpack.c.0.s8 %v665
    %v667 = vlaneseq
    %v668 = vshrl.u32 %v667, 7
    %v669 = vsub.s32 %v666, %v668
    %v670 = vrot.slane %v662, %v669
    %v672 = vunpack.c.l.s4 1966171168
    %v673 = vunpack.c.0.s8 %v672
    %v674 = vlaneseq
    %v675 = vshrl.u32 %v674, 7
    %v676 = vsub.s32 %v673, %v675
    %v677 = vrot.slane %v663, %v676
    %v678 = vcombine.low %v670, %v677
    %v679 = vcombine.low %v265, %v292
    %v681 = vunpack.c.l.s4 1966171168
    %v682 = vunpack.c.0.s8 %v681
    %v683 = vlaneseq
    %v684 = vshrl.u32 %v683, 7
    %v685 = vsub.s32 %v682, %v684
    %v686 = vrot.slane %v678, %v685
    %v688 = vunpack.c.l.s4 1966171168
    %v689 = vunpack.c.0.s8 %v688
    %v690 = vlaneseq
    %v691 = vshrl.u32 %v690, 7
    %v692 = vsub.s32 %v689, %v691
    %v693 = vrot.slane %v679, %v692
    %v694 = vcombine.low %v686, %v693
    %v695 = vcombine.low %v333, %v644
    %v697 = vunpack.c.l.s4 1966171168
    %v698 = vunpack.c.0.s8 %v697
    %v699 = vlaneseq
    %v700 = vshrl.u32 %v699, 7
    %v701 = vsub.s32 %v698, %v700
    %v702 = vrot.slane %v695, %v701
    %v703 = vcombine.low %v299, %v306
    %v705 = vunpack.c.l.s4 1966171168
    %v706 = vunpack.c.0.s8 %v705
    %v707 = vlaneseq
    %v708 = vshrl.u32 %v707, 7
    %v709 = vsub.s32 %v706, %v708
    %v710 = vrot.slane %v703, %v709
    %v712 = vunpack.c.l.s4 1966171168
    %v713 = vunpack.c.0.s8 %v712
    %v714 = vlaneseq
    %v715 = vshrl.u32 %v714, 7
    %v716 = vsub.s32 %v713, %v715
    %v717 = vrot.slane %v702, %v716
    %v718 = vcombine.low %v710, %v717
    %v722 = vpack.c.bf16 %v694, %v661
    %v723 = vpack.c.bf16 %v718, %v718
    %s724 = scalar_lea.vmem %s1, 32
    %v725 = vld [vmem:[%s724] sm:$0xf]
    %v726 = vld [vmem:[%s724 + $0x4] sm:$0xf]
    %v727 = vld [vmem:[%s724 + $0x8] sm:$0xf]
    %v728 = vld [vmem:[%s724 + $0xc] sm:$0xf]
    %v733 = vunpack.c.l.b16 %v725
    %v734 = vunpack.c.l.b16 %v726
    %v735 = vunpack.c.l.b16 %v727
    %v736 = vunpack.c.l.b16 %v728
    %v737 = vpack.c.b16 %v734, %v733
    %v738 = vpack.c.b16 %v736, %v735
    %v742 = vsel %vm494, %v722, 0
    %v745 = vsel %vm494, %v723, 0
    %747 = vmatprep.subr.bf16.mxu0 0
    %748 = vmatpush1.bf16.msra.mxu0 %v737
    %749 = vmatprep.subr.bf16.mxu0 0
    %750 = vmatpush1.bf16.msra.mxu0 %v738
    %751 = vmatprep.subr.bf16.mxu0 0
    %752 = vmatpush1.bf16.msra.mxu0 0
    %753 = vmatprep.subr.bf16.mxu0 0
    %754 = vmatpush1.bf16.msra.mxu0 0
    %755 = vmatprep.subr.bf16.mxu0 0
    %756 = vmatpush1.bf16.msra.mxu0 0
    %757 = vmatprep.subr.bf16.mxu0 0
    %758 = vmatpush1.bf16.msra.mxu0 0
    %759 = vmatprep.subr.bf16.mxu0 0
    %760 = vmatpush1.bf16.msra.mxu0 0
    %761 = vmatprep.subr.bf16.mxu0 0
    %762 = vmatpush1.bf16.msra.mxu0 0
    %763 = vmatprep.subr.bf16.mxu0 0
    %764 = vmatpush1.bf16.msra.mxu0 0
    %765 = vmatprep.subr.bf16.mxu0 0
    %766 = vmatpush1.bf16.msra.mxu0 0
    %767 = vmatprep.subr.bf16.mxu0 0
    %768 = vmatpush1.bf16.msra.mxu0 0
    %769 = vmatprep.subr.bf16.mxu0 0
    %770 = vmatpush1.bf16.msra.mxu0 0
    %771 = vmatprep.subr.bf16.mxu0 0
    %772 = vmatpush1.bf16.msra.mxu0 0
    %773 = vmatprep.subr.bf16.mxu0 0
    %774 = vmatpush1.bf16.msra.mxu0 0
    %775 = vmatprep.subr.bf16.mxu0 0
    %776 = vmatpush1.bf16.msra.mxu0 0
    %777 = vmatprep.subr.bf16.mxu0 0
    %778 = vmatpush1.bf16.msra.mxu0 0
    %779 = vmatprep.mubr.bf16.mxu0 0
    %780 = vmatmul.mubr.bf16.gmra.mrb[0].mxu0 %v742
    %v781 = vpop.f32.mrb[0].mxu0
    %v782 = vadd.f32 0.0, %v781
    %v783 = vpop.f32.mrb[0].mxu0
    %v784 = vpop.f32.mrb[0].mxu0
    %v785 = vadd.f32 0.0, %v784
    %v786 = vpop.f32.mrb[0].mxu0
    %787 = vmatprep.mubr.bf16.mxu0 0
    %788 = vmatmul.mubr.bf16.gmra.mrb[0].mxu0 %v745
    %v789 = vpop.f32.mrb[0].mxu0
    %v790 = vadd.f32 0.0, %v789
    %v791 = vpop.f32.mrb[0].mxu0
    %v792 = vpop.f32.mrb[0].mxu0
    %v793 = vpop.f32.mrb[0].mxu0
    %794 = vdwg.mxu0
    %v795 = vadd.f32 %v602, %v782
    %v796 = vadd.f32 %v605, %v785
    %v797 = vadd.f32 %v610, %v790
    %v798 = vcombine.high %v622, %v622
    %v800 = vunpack.c.l.s4 1966171168
    %v801 = vunpack.c.0.s8 %v800
    %v802 = vlaneseq
    %v803 = vshrl.u32 %v802, 7
    %v804 = vsub.s32 %v801, %v803
    %v805 = vrot.slane %v798, %v804
    %v806 = vcombine.high %v637, %v637
    %v808 = vunpack.c.l.s4 1966171168
    %v809 = vunpack.c.0.s8 %v808
    %v810 = vlaneseq
    %v811 = vshrl.u32 %v810, 7
    %v812 = vsub.s32 %v809, %v811
    %v813 = vrot.slane %v806, %v812
    %v814 = vcombine.low %v351, %v358
    %v815 = vcombine.low %v365, %v393
    %v817 = vunpack.c.l.s4 1966171168
    %v818 = vunpack.c.0.s8 %v817
    %v819 = vlaneseq
    %v820 = vshrl.u32 %v819, 7
    %v821 = vsub.s32 %v818, %v820
    %v822 = vrot.slane %v814, %v821
    %v824 = vunpack.c.l.s4 1966171168
    %v825 = vunpack.c.0.s8 %v824
    %v826 = vlaneseq
    %v827 = vshrl.u32 %v826, 7
    %v828 = vsub.s32 %v825, %v827
    %v829 = vrot.slane %v815, %v828
    %v830 = vcombine.low %v822, %v829
    %v831 = vcombine.low %v332, %v629
    %v832 = vcombine.low %v805, %v160
    %v834 = vunpack.c.l.s4 1966171168
    %v835 = vunpack.c.0.s8 %v834
    %v836 = vlaneseq
    %v837 = vshrl.u32 %v836, 7
    %v838 = vsub.s32 %v835, %v837
    %v839 = vrot.slane %v831, %v838
    %v841 = vunpack.c.l.s4 1966171168
    %v842 = vunpack.c.0.s8 %v841
    %v843 = vlaneseq
    %v844 = vshrl.u32 %v843, 7
    %v845 = vsub.s32 %v842, %v844
    %v846 = vrot.slane %v832, %v845
    %v847 = vcombine.low %v839, %v846
    %v848 = vcombine.low %v414, %v441
    %v850 = vunpack.c.l.s4 1966171168
    %v851 = vunpack.c.0.s8 %v850
    %v852 = vlaneseq
    %v853 = vshrl.u32 %v852, 7
    %v854 = vsub.s32 %v851, %v853
    %v855 = vrot.slane %v847, %v854
    %v857 = vunpack.c.l.s4 1966171168
    %v858 = vunpack.c.0.s8 %v857
    %v859 = vlaneseq
    %v860 = vshrl.u32 %v859, 7
    %v861 = vsub.s32 %v858, %v860
    %v862 = vrot.slane %v848, %v861
    %v863 = vcombine.low %v855, %v862
    %v864 = vcombine.low %v644, %v813
    %v866 = vunpack.c.l.s4 1966171168
    %v867 = vunpack.c.0.s8 %v866
    %v868 = vlaneseq
    %v869 = vshrl.u32 %v868, 7
    %v870 = vsub.s32 %v867, %v869
    %v871 = vrot.slane %v864, %v870
    %v872 = vcombine.low %v448, %v455
    %v874 = vunpack.c.l.s4 1966171168
    %v875 = vunpack.c.0.s8 %v874
    %v876 = vlaneseq
    %v877 = vshrl.u32 %v876, 7
    %v878 = vsub.s32 %v875, %v877
    %v879 = vrot.slane %v872, %v878
    %v881 = vunpack.c.l.s4 1966171168
    %v882 = vunpack.c.0.s8 %v881
    %v883 = vlaneseq
    %v884 = vshrl.u32 %v883, 7
    %v885 = vsub.s32 %v882, %v884
    %v886 = vrot.slane %v871, %v885
    %v887 = vcombine.low %v879, %v886
    %v891 = vpack.c.bf16 %v863, %v830
    %v892 = vpack.c.bf16 %v887, %v887
    %s893 = scalar_lea.vmem %s1, 48
    %v894 = vld [vmem:[%s893] sm:$0xf]
    %v895 = vld [vmem:[%s893 + $0x4] sm:$0xf]
    %v896 = vld [vmem:[%s893 + $0x8] sm:$0xf]
    %v897 = vld [vmem:[%s893 + $0xc] sm:$0xf]
    %v902 = vunpack.c.l.b16 %v894
    %v903 = vunpack.c.l.b16 %v895
    %v904 = vunpack.c.l.b16 %v896
    %v905 = vunpack.c.l.b16 %v897
    %v906 = vpack.c.b16 %v903, %v902
    %v907 = vpack.c.b16 %v905, %v904
    %v911 = vsel %vm494, %v891, 0
    %v914 = vsel %vm494, %v892, 0
    %916 = vmatprep.subr.bf16.mxu0 0
    %917 = vmatpush1.bf16.msra.mxu0 %v906
    %918 = vmatprep.subr.bf16.mxu0 0
    %919 = vmatpush1.bf16.msra.mxu0 %v907
    %920 = vmatprep.subr.bf16.mxu0 0
    %921 = vmatpush1.bf16.msra.mxu0 0
    %922 = vmatprep.subr.bf16.mxu0 0
    %923 = vmatpush1.bf16.msra.mxu0 0
    %924 = vmatprep.subr.bf16.mxu0 0
    %925 = vmatpush1.bf16.msra.mxu0 0
    %926 = vmatprep.subr.bf16.mxu0 0
    %927 = vmatpush1.bf16.msra.mxu0 0
    %928 = vmatprep.subr.bf16.mxu0 0
    %929 = vmatpush1.bf16.msra.mxu0 0
    %930 = vmatprep.subr.bf16.mxu0 0
    %931 = vmatpush1.bf16.msra.mxu0 0
    %932 = vmatprep.subr.bf16.mxu0 0
    %933 = vmatpush1.bf16.msra.mxu0 0
    %934 = vmatprep.subr.bf16.mxu0 0
    %935 = vmatpush1.bf16.msra.mxu0 0
    %936 = vmatprep.subr.bf16.mxu0 0
    %937 = vmatpush1.bf16.msra.mxu0 0
    %938 = vmatprep.subr.bf16.mxu0 0
    %939 = vmatpush1.bf16.msra.mxu0 0
    %940 = vmatprep.subr.bf16.mxu0 0
    %941 = vmatpush1.bf16.msra.mxu0 0
    %942 = vmatprep.subr.bf16.mxu0 0
    %943 = vmatpush1.bf16.msra.mxu0 0
    %944 = vmatprep.subr.bf16.mxu0 0
    %945 = vmatpush1.bf16.msra.mxu0 0
    %946 = vmatprep.subr.bf16.mxu0 0
    %947 = vmatpush1.bf16.msra.mxu0 0
    %948 = vmatprep.mubr.bf16.mxu0 0
    %949 = vmatmul.mubr.bf16.gmra.mrb[0].mxu0 %v911
    %v950 = vpop.f32.mrb[0].mxu0
    %v951 = vadd.f32 0.0, %v950
    %v952 = vpop.f32.mrb[0].mxu0
    %v953 = vpop.f32.mrb[0].mxu0
    %v954 = vadd.f32 0.0, %v953
    %v955 = vpop.f32.mrb[0].mxu0
    %956 = vmatprep.mubr.bf16.mxu0 0
    %957 = vmatmul.mubr.bf16.gmra.mrb[0].mxu0 %v914
    %v958 = vpop.f32.mrb[0].mxu0
    %v959 = vadd.f32 0.0, %v958
    %v960 = vpop.f32.mrb[0].mxu0
    %v961 = vpop.f32.mrb[0].mxu0
    %v962 = vpop.f32.mrb[0].mxu0
    %963 = vdwg.mxu0
    %v964 = vadd.f32 %v795, %v951
    %v965 = vadd.f32 %v796, %v954
    %v966 = vadd.f32 %v797, %v959
    %v967 = vcombine.high %v629, %v629
    %v968 = vcombine.high %v644, %v644
    %v969 = vcombine.low %v244, %v670
    %v971 = vunpack.c.l.s4 1966171168
    %v972 = vunpack.c.0.s8 %v971
    %v973 = vlaneseq
    %v974 = vshrl.u32 %v973, 7
    %v975 = vsub.s32 %v972, %v974
    %v976 = vrot.slane %v969, %v975
    %v977 = vcombine.low %v232, %v976
    %v978 = vcombine.low %v629, %v805
    %v979 = vcombine.low %v967, %v143
    %v981 = vunpack.c.l.s4 1966171168
    %v982 = vunpack.c.0.s8 %v981
    %v983 = vlaneseq
    %v984 = vshrl.u32 %v983, 7
    %v985 = vsub.s32 %v982, %v984
    %v986 = vrot.slane %v978, %v985
    %v988 = vunpack.c.l.s4 1966171168
    %v989 = vunpack.c.0.s8 %v988
    %v990 = vlaneseq
    %v991 = vshrl.u32 %v990, 7
    %v992 = vsub.s32 %v989, %v991
    %v993 = vrot.slane %v979, %v992
    %v994 = vcombine.low %v986, %v993
    %v996 = vunpack.c.l.s4 1966171168
    %v997 = vunpack.c.0.s8 %v996
    %v998 = vlaneseq
    %v999 = vshrl.u32 %v998, 7
    %v1000 = vsub.s32 %v997, %v999
    %v1001 = vrot.slane %v994, %v1000
    %v1002 = vcombine.low %v1001, %v314
    %v1003 = vcombine.low %v813, %v968
    %v1005 = vunpack.c.l.s4 1966171168
    %v1006 = vunpack.c.0.s8 %v1005
    %v1007 = vlaneseq
    %v1008 = vshrl.u32 %v1007, 7
    %v1009 = vsub.s32 %v1006, %v1008
    %v1010 = vrot.slane %v1003, %v1009
    %v1011 = vcombine.low %v306, %v702
    %v1013 = vunpack.c.l.s4 1966171168
    %v1014 = vunpack.c.0.s8 %v1013
    %v1015 = vlaneseq
    %v1016 = vshrl.u32 %v1015, 7
    %v1017 = vsub.s32 %v1014, %v1016
    %v1018 = vrot.slane %v1011, %v1017
    %v1020 = vunpack.c.l.s4 1966171168
    %v1021 = vunpack.c.0.s8 %v1020
    %v1022 = vlaneseq
    %v1023 = vshrl.u32 %v1022, 7
    %v1024 = vsub.s32 %v1021, %v1023
    %v1025 = vrot.slane %v1010, %v1024
    %v1026 = vcombine.low %v1018, %v1025
    %v1030 = vpack.c.bf16 %v1002, %v977
    %v1031 = vpack.c.bf16 %v1026, %v1026
    %s1032 = scalar_lea.vmem %s1, 64
    %v1033 = vld [vmem:[%s1032] sm:$0xf]
    %v1034 = vld [vmem:[%s1032 + $0x4] sm:$0xf]
    %v1035 = vld [vmem:[%s1032 + $0x8] sm:$0xf]
    %v1036 = vld [vmem:[%s1032 + $0xc] sm:$0xf]
    %v1041 = vunpack.c.l.b16 %v1033
    %v1042 = vunpack.c.l.b16 %v1034
    %v1043 = vunpack.c.l.b16 %v1035
    %v1044 = vunpack.c.l.b16 %v1036
    %v1045 = vpack.c.b16 %v1042, %v1041
    %v1046 = vpack.c.b16 %v1044, %v1043
    %v1050 = vsel %vm494, %v1030, 0
    %v1053 = vsel %vm494, %v1031, 0
    %1055 = vmatprep.subr.bf16.mxu0 0
    %1056 = vmatpush1.bf16.msra.mxu0 %v1045
    %1057 = vmatprep.subr.bf16.mxu0 0
    %1058 = vmatpush1.bf16.msra.mxu0 %v1046
    %1059 = vmatprep.subr.bf16.mxu0 0
    %1060 = vmatpush1.bf16.msra.mxu0 0
    %1061 = vmatprep.subr.bf16.mxu0 0
    %1062 = vmatpush1.bf16.msra.mxu0 0
    %1063 = vmatprep.subr.bf16.mxu0 0
    %1064 = vmatpush1.bf16.msra.mxu0 0
    %1065 = vmatprep.subr.bf16.mxu0 0
    %1066 = vmatpush1.bf16.msra.mxu0 0
    %1067 = vmatprep.subr.bf16.mxu0 0
    %1068 = vmatpush1.bf16.msra.mxu0 0
    %1069 = vmatprep.subr.bf16.mxu0 0
    %1070 = vmatpush1.bf16.msra.mxu0 0
    %1071 = vmatprep.subr.bf16.mxu0 0
    %1072 = vmatpush1.bf16.msra.mxu0 0
    %1073 = vmatprep.subr.bf16.mxu0 0
    %1074 = vmatpush1.bf16.msra.mxu0 0
    %1075 = vmatprep.subr.bf16.mxu0 0
    %1076 = vmatpush1.bf16.msra.mxu0 0
    %1077 = vmatprep.subr.bf16.mxu0 0
    %1078 = vmatpush1.bf16.msra.mxu0 0
    %1079 = vmatprep.subr.bf16.mxu0 0
    %1080 = vmatpush1.bf16.msra.mxu0 0
    %1081 = vmatprep.subr.bf16.mxu0 0
    %1082 = vmatpush1.bf16.msra.mxu0 0
    %1083 = vmatprep.subr.bf16.mxu0 0
    %1084 = vmatpush1.bf16.msra.mxu0 0
    %1085 = vmatprep.subr.bf16.mxu0 0
    %1086 = vmatpush1.bf16.msra.mxu0 0
    %1087 = vmatprep.mubr.bf16.mxu0 0
    %1088 = vmatmul.mubr.bf16.gmra.mrb[0].mxu0 %v1050
    %v1089 = vpop.f32.mrb[0].mxu0
    %v1090 = vadd.f32 0.0, %v1089
    %v1091 = vpop.f32.mrb[0].mxu0
    %v1092 = vpop.f32.mrb[0].mxu0
    %v1093 = vadd.f32 0.0, %v1092
    %v1094 = vpop.f32.mrb[0].mxu0
    %1095 = vmatprep.mubr.bf16.mxu0 0
    %1096 = vmatmul.mubr.bf16.gmra.mrb[0].mxu0 %v1053
    %v1097 = vpop.f32.mrb[0].mxu0
    %v1098 = vadd.f32 0.0, %v1097
    %v1099 = vpop.f32.mrb[0].mxu0
    %v1100 = vpop.f32.mrb[0].mxu0
    %v1101 = vpop.f32.mrb[0].mxu0
    %1102 = vdwg.mxu0
    %v1103 = vadd.f32 %v964, %v1090
    %v1104 = vadd.f32 %v965, %v1093
    %v1105 = vadd.f32 %v966, %v1098
    %v1106 = vcombine.high %v805, %v805
    %v1107 = vcombine.high %v813, %v813
    %v1108 = vcombine.low %v393, %v839
    %v1110 = vunpack.c.l.s4 1966171168
    %v1111 = vunpack.c.0.s8 %v1110
    %v1112 = vlaneseq
    %v1113 = vshrl.u32 %v1112, 7
    %v1114 = vsub.s32 %v1111, %v1113
    %v1115 = vrot.slane %v1108, %v1114
    %v1116 = vcombine.low %v381, %v1115
    %v1117 = vcombine.low %v805, %v967
    %v1118 = vcombine.low %v1106, %v157
    %v1120 = vunpack.c.l.s4 1966171168
    %v1121 = vunpack.c.0.s8 %v1120
    %v1122 = vlaneseq
    %v1123 = vshrl.u32 %v1122, 7
    %v1124 = vsub.s32 %v1121, %v1123
    %v1125 = vrot.slane %v1117, %v1124
    %v1127 = vunpack.c.l.s4 1966171168
    %v1128 = vunpack.c.0.s8 %v1127
    %v1129 = vlaneseq
    %v1130 = vshrl.u32 %v1129, 7
    %v1131 = vsub.s32 %v1128, %v1130
    %v1132 = vrot.slane %v1118, %v1131
    %v1133 = vcombine.low %v1125, %v1132
    %v1135 = vunpack.c.l.s4 1966171168
    %v1136 = vunpack.c.0.s8 %v1135
    %v1137 = vlaneseq
    %v1138 = vshrl.u32 %v1137, 7
    %v1139 = vsub.s32 %v1136, %v1138
    %v1140 = vrot.slane %v1133, %v1139
    %v1141 = vcombine.low %v1140, %v463
    %v1142 = vcombine.low %v968, %v1107
    %v1144 = vunpack.c.l.s4 1966171168
    %v1145 = vunpack.c.0.s8 %v1144
    %v1146 = vlaneseq
    %v1147 = vshrl.u32 %v1146, 7
    %v1148 = vsub.s32 %v1145, %v1147
    %v1149 = vrot.slane %v1142, %v1148
    %v1150 = vcombine.low %v455, %v871
    %v1152 = vunpack.c.l.s4 1966171168
    %v1153 = vunpack.c.0.s8 %v1152
    %v1154 = vlaneseq
    %v1155 = vshrl.u32 %v1154, 7
    %v1156 = vsub.s32 %v1153, %v1155
    %v1157 = vrot.slane %v1150, %v1156
    %v1159 = vunpack.c.l.s4 1966171168
    %v1160 = vunpack.c.0.s8 %v1159
    %v1161 = vlaneseq
    %v1162 = vshrl.u32 %v1161, 7
    %v1163 = vsub.s32 %v1160, %v1162
    %v1164 = vrot.slane %v1149, %v1163
    %v1165 = vcombine.low %v1157, %v1164
    %v1169 = vpack.c.bf16 %v1141, %v1116
    %v1170 = vpack.c.bf16 %v1165, %v1165
    %s1171 = scalar_lea.vmem %s1, 80
    %v1172 = vld [vmem:[%s1171] sm:$0xf]
    %v1173 = vld [vmem:[%s1171 + $0x4] sm:$0xf]
    %v1174 = vld [vmem:[%s1171 + $0x8] sm:$0xf]
    %v1175 = vld [vmem:[%s1171 + $0xc] sm:$0xf]
    %v1180 = vunpack.c.l.b16 %v1172
    %v1181 = vunpack.c.l.b16 %v1173
    %v1182 = vunpack.c.l.b16 %v1174
    %v1183 = vunpack.c.l.b16 %v1175
    %v1184 = vpack.c.b16 %v1181, %v1180
    %v1185 = vpack.c.b16 %v1183, %v1182
    %v1189 = vsel %vm494, %v1169, 0
    %v1192 = vsel %vm494, %v1170, 0
    %1194 = vmatprep.subr.bf16.mxu0 0
    %1195 = vmatpush1.bf16.msra.mxu0 %v1184
    %1196 = vmatprep.subr.bf16.mxu0 0
    %1197 = vmatpush1.bf16.msra.mxu0 %v1185
    %1198 = vmatprep.subr.bf16.mxu0 0
    %1199 = vmatpush1.bf16.msra.mxu0 0
    %1200 = vmatprep.subr.bf16.mxu0 0
    %1201 = vmatpush1.bf16.msra.mxu0 0
    %1202 = vmatprep.subr.bf16.mxu0 0
    %1203 = vmatpush1.bf16.msra.mxu0 0
    %1204 = vmatprep.subr.bf16.mxu0 0
    %1205 = vmatpush1.bf16.msra.mxu0 0
    %1206 = vmatprep.subr.bf16.mxu0 0
    %1207 = vmatpush1.bf16.msra.mxu0 0
    %1208 = vmatprep.subr.bf16.mxu0 0
    %1209 = vmatpush1.bf16.msra.mxu0 0
    %1210 = vmatprep.subr.bf16.mxu0 0
    %1211 = vmatpush1.bf16.msra.mxu0 0
    %1212 = vmatprep.subr.bf16.mxu0 0
    %1213 = vmatpush1.bf16.msra.mxu0 0
    %1214 = vmatprep.subr.bf16.mxu0 0
    %1215 = vmatpush1.bf16.msra.mxu0 0
    %1216 = vmatprep.subr.bf16.mxu0 0
    %1217 = vmatpush1.bf16.msra.mxu0 0
    %1218 = vmatprep.subr.bf16.mxu0 0
    %1219 = vmatpush1.bf16.msra.mxu0 0
    %1220 = vmatprep.subr.bf16.mxu0 0
    %1221 = vmatpush1.bf16.msra.mxu0 0
    %1222 = vmatprep.subr.bf16.mxu0 0
    %1223 = vmatpush1.bf16.msra.mxu0 0
    %1224 = vmatprep.subr.bf16.mxu0 0
    %1225 = vmatpush1.bf16.msra.mxu0 0
    %1226 = vmatprep.mubr.bf16.mxu0 0
    %1227 = vmatmul.mubr.bf16.gmra.mrb[0].mxu0 %v1189
    %v1228 = vpop.f32.mrb[0].mxu0
    %v1229 = vadd.f32 0.0, %v1228
    %v1230 = vpop.f32.mrb[0].mxu0
    %v1231 = vpop.f32.mrb[0].mxu0
    %v1232 = vadd.f32 0.0, %v1231
    %v1233 = vpop.f32.mrb[0].mxu0
    %1234 = vmatprep.mubr.bf16.mxu0 0
    %1235 = vmatmul.mubr.bf16.gmra.mrb[0].mxu0 %v1192
    %v1236 = vpop.f32.mrb[0].mxu0
    %v1237 = vadd.f32 0.0, %v1236
    %v1238 = vpop.f32.mrb[0].mxu0
    %v1239 = vpop.f32.mrb[0].mxu0
    %v1240 = vpop.f32.mrb[0].mxu0
    %1241 = vdwg.mxu0
    %v1242 = vadd.f32 %v1103, %v1229
    %v1243 = vadd.f32 %v1104, %v1232
    %v1244 = vadd.f32 %v1105, %v1237
    %v1248 = vunpack.c.l.s4 1966171168
    %v1249 = vunpack.c.0.s8 %v1248
    %v1250 = vlaneseq
    %v1251 = vshrl.u32 %v1250, 7
    %v1252 = vsub.s32 %v1249, %v1251
    %v1253 = vrot.slane %v33, %v1252
    %v1255 = vunpack.c.l.s4 1966171168
    %v1256 = vunpack.c.0.s8 %v1255
    %v1257 = vlaneseq
    %v1258 = vshrl.u32 %v1257, 7
    %v1259 = vsub.s32 %v1256, %v1258
    %v1260 = vrot.slane %v1253, %v1259
    %v1262 = vunpack.c.l.s4 1966171168
    %v1263 = vunpack.c.0.s8 %v1262
    %v1264 = vlaneseq
    %v1265 = vshrl.u32 %v1264, 7
    %v1266 = vsub.s32 %v1263, %v1265
    %v1267 = vrot.slane %v36, %v1266
    %v1269 = vunpack.c.l.s4 1966171168
    %v1270 = vunpack.c.0.s8 %v1269
    %v1271 = vlaneseq
    %v1272 = vshrl.u32 %v1271, 7
    %v1273 = vsub.s32 %v1270, %v1272
    %v1274 = vrot.slane %v1267, %v1273
    %v1275 = vcombine.low %v670, %v986
    %v1277 = vunpack.c.l.s4 1966171168
    %v1278 = vunpack.c.0.s8 %v1277
    %v1279 = vlaneseq
    %v1280 = vshrl.u32 %v1279, 7
    %v1281 = vsub.s32 %v1278, %v1280
    %v1282 = vrot.slane %v1275, %v1281
    %v1283 = vcombine.low %v660, %v1282
    %v1284 = vcombine.low %v967, %v1106
    %v1285 = vcombine.low %v1260, %v159
    %v1287 = vunpack.c.l.s4 1966171168
    %v1288 = vunpack.c.0.s8 %v1287
    %v1289 = vlaneseq
    %v1290 = vshrl.u32 %v1289, 7
    %v1291 = vsub.s32 %v1288, %v1290
    %v1292 = vrot.slane %v1284, %v1291
    %v1294 = vunpack.c.l.s4 1966171168
    %v1295 = vunpack.c.0.s8 %v1294
    %v1296 = vlaneseq
    %v1297 = vshrl.u32 %v1296, 7
    %v1298 = vsub.s32 %v1295, %v1297
    %v1299 = vrot.slane %v1285, %v1298
    %v1300 = vcombine.low %v1292, %v1299
    %v1302 = vunpack.c.l.s4 1966171168
    %v1303 = vunpack.c.0.s8 %v1302
    %v1304 = vlaneseq
    %v1305 = vshrl.u32 %v1304, 7
    %v1306 = vsub.s32 %v1303, %v1305
    %v1307 = vrot.slane %v1300, %v1306
    %v1308 = vcombine.low %v1307, %v710
    %v1309 = vcombine.low %v1107, %v1274
    %v1311 = vunpack.c.l.s4 1966171168
    %v1312 = vunpack.c.0.s8 %v1311
    %v1313 = vlaneseq
    %v1314 = vshrl.u32 %v1313, 7
    %v1315 = vsub.s32 %v1312, %v1314
    %v1316 = vrot.slane %v1309, %v1315
    %v1317 = vcombine.low %v702, %v1010
    %v1319 = vunpack.c.l.s4 1966171168
    %v1320 = vunpack.c.0.s8 %v1319
    %v1321 = vlaneseq
    %v1322 = vshrl.u32 %v1321, 7
    %v1323 = vsub.s32 %v1320, %v1322
    %v1324 = vrot.slane %v1317, %v1323
    %v1326 = vunpack.c.l.s4 1966171168
    %v1327 = vunpack.c.0.s8 %v1326
    %v1328 = vlaneseq
    %v1329 = vshrl.u32 %v1328, 7
    %v1330 = vsub.s32 %v1327, %v1329
    %v1331 = vrot.slane %v1316, %v1330
    %v1332 = vcombine.low %v1324, %v1331
    %v1336 = vpack.c.bf16 %v1308, %v1283
    %v1337 = vpack.c.bf16 %v1332, %v1332
    %s1338 = scalar_lea.vmem %s1, 96
    %v1339 = vld [vmem:[%s1338] sm:$0xf]
    %v1340 = vld [vmem:[%s1338 + $0x4] sm:$0xf]
    %v1341 = vld [vmem:[%s1338 + $0x8] sm:$0xf]
    %v1342 = vld [vmem:[%s1338 + $0xc] sm:$0xf]
    %v1347 = vunpack.c.l.b16 %v1339
    %v1348 = vunpack.c.l.b16 %v1340
    %v1349 = vunpack.c.l.b16 %v1341
    %v1350 = vunpack.c.l.b16 %v1342
    %v1351 = vpack.c.b16 %v1348, %v1347
    %v1352 = vpack.c.b16 %v1350, %v1349
    %v1356 = vsel %vm494, %v1336, 0
    %v1359 = vsel %vm494, %v1337, 0
    %1361 = vmatprep.subr.bf16.mxu0 0
    %1362 = vmatpush1.bf16.msra.mxu0 %v1351
    %1363 = vmatprep.subr.bf16.mxu0 0
    %1364 = vmatpush1.bf16.msra.mxu0 %v1352
    %1365 = vmatprep.subr.bf16.mxu0 0
    %1366 = vmatpush1.bf16.msra.mxu0 0
    %1367 = vmatprep.subr.bf16.mxu0 0
    %1368 = vmatpush1.bf16.msra.mxu0 0
    %1369 = vmatprep.subr.bf16.mxu0 0
    %1370 = vmatpush1.bf16.msra.mxu0 0
    %1371 = vmatprep.subr.bf16.mxu0 0
    %1372 = vmatpush1.bf16.msra.mxu0 0
    %1373 = vmatprep.subr.bf16.mxu0 0
    %1374 = vmatpush1.bf16.msra.mxu0 0
    %1375 = vmatprep.subr.bf16.mxu0 0
    %1376 = vmatpush1.bf16.msra.mxu0 0
    %1377 = vmatprep.subr.bf16.mxu0 0
    %1378 = vmatpush1.bf16.msra.mxu0 0
    %1379 = vmatprep.subr.bf16.mxu0 0
    %1380 = vmatpush1.bf16.msra.mxu0 0
    %1381 = vmatprep.subr.bf16.mxu0 0
    %1382 = vmatpush1.bf16.msra.mxu0 0
    %1383 = vmatprep.subr.bf16.mxu0 0
    %1384 = vmatpush1.bf16.msra.mxu0 0
    %1385 = vmatprep.subr.bf16.mxu0 0
    %1386 = vmatpush1.bf16.msra.mxu0 0
    %1387 = vmatprep.subr.bf16.mxu0 0
    %1388 = vmatpush1.bf16.msra.mxu0 0
    %1389 = vmatprep.subr.bf16.mxu0 0
    %1390 = vmatpush1.bf16.msra.mxu0 0
    %1391 = vmatprep.subr.bf16.mxu0 0
    %1392 = vmatpush1.bf16.msra.mxu0 0
    %1393 = vmatprep.mubr.bf16.mxu0 0
    %1394 = vmatmul.mubr.bf16.gmra.mrb[0].mxu0 %v1356
    %v1395 = vpop.f32.mrb[0].mxu0
    %v1396 = vadd.f32 0.0, %v1395
    %v1397 = vpop.f32.mrb[0].mxu0
    %v1398 = vpop.f32.mrb[0].mxu0
    %v1399 = vadd.f32 0.0, %v1398
    %v1400 = vpop.f32.mrb[0].mxu0
    %1401 = vmatprep.mubr.bf16.mxu0 0
    %1402 = vmatmul.mubr.bf16.gmra.mrb[0].mxu0 %v1359
    %v1403 = vpop.f32.mrb[0].mxu0
    %v1404 = vadd.f32 0.0, %v1403
    %v1405 = vpop.f32.mrb[0].mxu0
    %v1406 = vpop.f32.mrb[0].mxu0
    %v1407 = vpop.f32.mrb[0].mxu0
    %1408 = vdwg.mxu0
    %v1409 = vadd.f32 %v1242, %v1396
    %v1410 = vadd.f32 %v1243, %v1399
    %v1411 = vadd.f32 %v1244, %v1404
    %v1415 = vcombine.high %v1409, %v1409
    %v1417 = vunpack.c.l.s4 1966171168
    %v1418 = vunpack.c.0.s8 %v1417
    %v1419 = vlaneseq
    %v1420 = vshrl.u32 %v1419, 7
    %v1421 = vsub.s32 %v1418, %v1420
    %v1422 = vrot.slane %v1409, %v1421
    %v1424 = vunpack.c.l.s4 1966171168
    %v1425 = vunpack.c.0.s8 %v1424
    %v1426 = vlaneseq
    %v1427 = vshrl.u32 %v1426, 7
    %v1428 = vsub.s32 %v1425, %v1427
    %v1429 = vrot.slane %v1415, %v1428
    %v1430 = vcombine.high %v1422, %v1422
    %v1431 = vcombine.high %v1429, %v1429
    %v1433 = vunpack.c.l.s4 1966171168
    %v1434 = vunpack.c.0.s8 %v1433
    %v1435 = vlaneseq
    %v1436 = vshrl.u32 %v1435, 7
    %v1437 = vsub.s32 %v1434, %v1436
    %v1438 = vrot.slane %v1422, %v1437
    %v1440 = vunpack.c.l.s4 1966171168
    %v1441 = vunpack.c.0.s8 %v1440
    %v1442 = vlaneseq
    %v1443 = vshrl.u32 %v1442, 7
    %v1444 = vsub.s32 %v1441, %v1443
    %v1445 = vrot.slane %v1429, %v1444
    %v1447 = vunpack.c.l.s4 1966171168
    %v1448 = vunpack.c.0.s8 %v1447
    %v1449 = vlaneseq
    %v1450 = vshrl.u32 %v1449, 7
    %v1451 = vsub.s32 %v1448, %v1450
    %v1452 = vrot.slane %v1430, %v1451
    %v1454 = vunpack.c.l.s4 1966171168
    %v1455 = vunpack.c.0.s8 %v1454
    %v1456 = vlaneseq
    %v1457 = vshrl.u32 %v1456, 7
    %v1458 = vsub.s32 %v1455, %v1457
    %v1459 = vrot.slane %v1431, %v1458
    %v1460 = vcombine.high %v1438, %v1438
    %v1461 = vcombine.high %v1445, %v1445
    %v1462 = vcombine.high %v1452, %v1452
    %v1463 = vcombine.high %v1459, %v1459
    %v1464 = vcombine.high %v1410, %v1410
    %v1466 = vunpack.c.l.s4 1966171168
    %v1467 = vunpack.c.0.s8 %v1466
    %v1468 = vlaneseq
    %v1469 = vshrl.u32 %v1468, 7
    %v1470 = vsub.s32 %v1467, %v1469
    %v1471 = vrot.slane %v1410, %v1470
    %v1473 = vunpack.c.l.s4 1966171168
    %v1474 = vunpack.c.0.s8 %v1473
    %v1475 = vlaneseq
    %v1476 = vshrl.u32 %v1475, 7
    %v1477 = vsub.s32 %v1474, %v1476
    %v1478 = vrot.slane %v1464, %v1477
    %v1479 = vcombine.high %v1471, %v1471
    %v1480 = vcombine.high %v1478, %v1478
    %v1482 = vunpack.c.l.s4 1966171168
    %v1483 = vunpack.c.0.s8 %v1482
    %v1484 = vlaneseq
    %v1485 = vshrl.u32 %v1484, 7
    %v1486 = vsub.s32 %v1483, %v1485
    %v1487 = vrot.slane %v1471, %v1486
    %v1489 = vunpack.c.l.s4 1966171168
    %v1490 = vunpack.c.0.s8 %v1489
    %v1491 = vlaneseq
    %v1492 = vshrl.u32 %v1491, 7
    %v1493 = vsub.s32 %v1490, %v1492
    %v1494 = vrot.slane %v1478, %v1493
    %v1496 = vunpack.c.l.s4 1966171168
    %v1497 = vunpack.c.0.s8 %v1496
    %v1498 = vlaneseq
    %v1499 = vshrl.u32 %v1498, 7
    %v1500 = vsub.s32 %v1497, %v1499
    %v1501 = vrot.slane %v1479, %v1500
    %v1503 = vunpack.c.l.s4 1966171168
    %v1504 = vunpack.c.0.s8 %v1503
    %v1505 = vlaneseq
    %v1506 = vshrl.u32 %v1505, 7
    %v1507 = vsub.s32 %v1504, %v1506
    %v1508 = vrot.slane %v1480, %v1507
    %v1509 = vcombine.high %v1487, %v1487
    %v1510 = vcombine.high %v1494, %v1494
    %v1511 = vcombine.high %v1501, %v1501
    %v1512 = vcombine.high %v1508, %v1508
    %v1513 = vcombine.high %v1411, %v1411
    %v1515 = vunpack.c.l.s4 1966171168
    %v1516 = vunpack.c.0.s8 %v1515
    %v1517 = vlaneseq
    %v1518 = vshrl.u32 %v1517, 7
    %v1519 = vsub.s32 %v1516, %v1518
    %v1520 = vrot.slane %v1411, %v1519
    %v1522 = vunpack.c.l.s4 1966171168
    %v1523 = vunpack.c.0.s8 %v1522
    %v1524 = vlaneseq
    %v1525 = vshrl.u32 %v1524, 7
    %v1526 = vsub.s32 %v1523, %v1525
    %v1527 = vrot.slane %v1513, %v1526
    %v1528 = vcombine.high %v1520, %v1520
    %v1529 = vcombine.high %v1527, %v1527
    %v1531 = vunpack.c.l.s4 1966171168
    %v1532 = vunpack.c.0.s8 %v1531
    %v1533 = vlaneseq
    %v1534 = vshrl.u32 %v1533, 7
    %v1535 = vsub.s32 %v1532, %v1534
    %v1536 = vrot.slane %v1520, %v1535
    %v1538 = vunpack.c.l.s4 1966171168
    %v1539 = vunpack.c.0.s8 %v1538
    %v1540 = vlaneseq
    %v1541 = vshrl.u32 %v1540, 7
    %v1542 = vsub.s32 %v1539, %v1541
    %v1543 = vrot.slane %v1527, %v1542
    %v1545 = vunpack.c.l.s4 1966171168
    %v1546 = vunpack.c.0.s8 %v1545
    %v1547 = vlaneseq
    %v1548 = vshrl.u32 %v1547, 7
    %v1549 = vsub.s32 %v1546, %v1548
    %v1550 = vrot.slane %v1528, %v1549
    %v1552 = vunpack.c.l.s4 1966171168
    %v1553 = vunpack.c.0.s8 %v1552
    %v1554 = vlaneseq
    %v1555 = vshrl.u32 %v1554, 7
    %v1556 = vsub.s32 %v1553, %v1555
    %v1557 = vrot.slane %v1529, %v1556
    %v1558 = vcombine.high %v1536, %v1536
    %v1559 = vcombine.high %v1550, %v1550
    %v1582 = vld [vmem:[%s2] sm:$0x1]
    %v1584 = vlaneseq
    %v1585 = vshrl.u32 %v1584, 7
    %v1586 = vsub.s32 0, %v1585
    %v1587 = vrot.slane %v1582, %v1586
    %v1588 = vcombine.high %v1587, %v1587
    %v1590 = vunpack.c.l.s4 1966171168
    %v1591 = vunpack.c.0.s8 %v1590
    %v1592 = vlaneseq
    %v1593 = vshrl.u32 %v1592, 7
    %v1594 = vsub.s32 %v1591, %v1593
    %v1595 = vrot.slane %v1587, %v1594
    %v1597 = vunpack.c.l.s4 1966171168
    %v1598 = vunpack.c.0.s8 %v1597
    %v1599 = vlaneseq
    %v1600 = vshrl.u32 %v1599, 7
    %v1601 = vsub.s32 %v1598, %v1600
    %v1602 = vrot.slane %v1588, %v1601
    %v1603 = vcombine.high %v1595, %v1595
    %v1604 = vcombine.high %v1602, %v1602
    %v1606 = vunpack.c.l.s4 1966171168
    %v1607 = vunpack.c.0.s8 %v1606
    %v1608 = vlaneseq
    %v1609 = vshrl.u32 %v1608, 7
    %v1610 = vsub.s32 %v1607, %v1609
    %v1611 = vrot.slane %v1595, %v1610
    %v1613 = vunpack.c.l.s4 1966171168
    %v1614 = vunpack.c.0.s8 %v1613
    %v1615 = vlaneseq
    %v1616 = vshrl.u32 %v1615, 7
    %v1617 = vsub.s32 %v1614, %v1616
    %v1618 = vrot.slane %v1602, %v1617
    %v1620 = vunpack.c.l.s4 1966171168
    %v1621 = vunpack.c.0.s8 %v1620
    %v1622 = vlaneseq
    %v1623 = vshrl.u32 %v1622, 7
    %v1624 = vsub.s32 %v1621, %v1623
    %v1625 = vrot.slane %v1603, %v1624
    %v1627 = vunpack.c.l.s4 1966171168
    %v1628 = vunpack.c.0.s8 %v1627
    %v1629 = vlaneseq
    %v1630 = vshrl.u32 %v1629, 7
    %v1631 = vsub.s32 %v1628, %v1630
    %v1632 = vrot.slane %v1604, %v1631
    %v1633 = vcombine.high %v1611, %v1611
    %v1634 = vcombine.high %v1618, %v1618
    %v1635 = vcombine.high %v1625, %v1625
    %v1636 = vcombine.high %v1632, %v1632
    %v1645 = vadd.f32 %v1438, %v1611
    %v1646 = vadd.f32 %v1452, %v1625
    %v1647 = vadd.f32 %v1460, %v1633
    %v1648 = vadd.f32 %v1462, %v1635
    %v1649 = vadd.f32 %v1445, %v1618
    %v1650 = vadd.f32 %v1459, %v1632
    %v1651 = vadd.f32 %v1461, %v1634
    %v1652 = vadd.f32 %v1463, %v1636
    %v1653 = vadd.f32 %v1487, %v1611
    %v1654 = vadd.f32 %v1501, %v1625
    %v1655 = vadd.f32 %v1509, %v1633
    %v1656 = vadd.f32 %v1511, %v1611
    %v1657 = vadd.f32 %v1494, %v1625
    %v1658 = vadd.f32 %v1508, %v1633
    %v1659 = vadd.f32 %v1510, %v1635
    %v1660 = vadd.f32 %v1512, %v1618
    %v1661 = vadd.f32 %v1536, %v1632
    %v1662 = vadd.f32 %v1550, %v1634
    %v1663 = vadd.f32 %v1558, %v1636
    %v1664 = vadd.f32 %v1559, %v1611
    %v1665 = vadd.f32 %v1543, %v1625
    %v1666 = vadd.f32 %v1557, %v1633
    %v1667 = vand.u32 2147483647, %v1645
    %v1668 = vand.u32 2147483647, %v1646
    %v1669 = vand.u32 2147483647, %v1647
    %v1670 = vand.u32 2147483647, %v1648
    %v1671 = vand.u32 2147483647, %v1649
    %v1672 = vand.u32 2147483647, %v1650
    %v1673 = vand.u32 2147483647, %v1651
    %v1674 = vand.u32 2147483647, %v1652
    %v1675 = vand.u32 2147483647, %v1653
    %v1676 = vand.u32 2147483647, %v1654
    %v1677 = vand.u32 2147483647, %v1655
    %v1678 = vand.u32 2147483647, %v1656
    %v1679 = vand.u32 2147483647, %v1657
    %v1680 = vand.u32 2147483647, %v1658
    %v1681 = vand.u32 2147483647, %v1659
    %v1682 = vand.u32 2147483647, %v1660
    %v1683 = vand.u32 2147483647, %v1661
    %v1684 = vand.u32 2147483647, %v1662
    %v1685 = vand.u32 2147483647, %v1663
    %v1686 = vand.u32 2147483647, %v1664
    %v1687 = vand.u32 2147483647, %v1665
    %v1688 = vand.u32 2147483647, %v1666
    %v1689 = vsub.f32 0.0, %v1667
    %v1690 = vsub.f32 0.0, %v1668
    %v1691 = vsub.f32 0.0, %v1669
    %v1692 = vsub.f32 0.0, %v1670
    %v1693 = vsub.f32 0.0, %v1671
    %v1694 = vsub.f32 0.0, %v1672
    %v1695 = vsub.f32 0.0, %v1673
    %v1696 = vsub.f32 0.0, %v1674
    %v1697 = vsub.f32 0.0, %v1675
    %v1698 = vsub.f32 0.0, %v1676
    %v1699 = vsub.f32 0.0, %v1677
    %v1700 = vsub.f32 0.0, %v1678
    %v1701 = vsub.f32 0.0, %v1679
    %v1702 = vsub.f32 0.0, %v1680
    %v1703 = vsub.f32 0.0, %v1681
    %v1704 = vsub.f32 0.0, %v1682
    %v1705 = vsub.f32 0.0, %v1683
    %v1706 = vsub.f32 0.0, %v1684
    %v1707 = vsub.f32 0.0, %v1685
    %v1708 = vsub.f32 0.0, %v1686
    %v1709 = vsub.f32 0.0, %v1687
    %v1710 = vsub.f32 0.0, %v1688
    %v1711 = vmul.f32 %v1689, 1.442695
    %v1712 = vpow.pop %v1711
    %v1713 = vmul.f32 %v1690, 1.442695
    %v1714 = vpow.pop %v1713
    %v1715 = vmul.f32 %v1691, 1.442695
    %v1716 = vpow.pop %v1715
    %v1717 = vmul.f32 %v1692, 1.442695
    %v1718 = vpow.pop %v1717
    %v1719 = vmul.f32 %v1693, 1.442695
    %v1720 = vpow.pop %v1719
    %v1721 = vmul.f32 %v1694, 1.442695
    %v1722 = vpow.pop %v1721
    %v1723 = vmul.f32 %v1695, 1.442695
    %v1724 = vpow.pop %v1723
    %v1725 = vmul.f32 %v1696, 1.442695
    %v1726 = vpow.pop %v1725
    %v1727 = vmul.f32 %v1697, 1.442695
    %v1728 = vpow.pop %v1727
    %v1729 = vmul.f32 %v1698, 1.442695
    %v1730 = vpow.pop %v1729
    %v1731 = vmul.f32 %v1699, 1.442695
    %v1732 = vpow.pop %v1731
    %v1733 = vmul.f32 %v1700, 1.442695
    %v1734 = vpow.pop %v1733
    %v1735 = vmul.f32 %v1701, 1.442695
    %v1736 = vpow.pop %v1735
    %v1737 = vmul.f32 %v1702, 1.442695
    %v1738 = vpow.pop %v1737
    %v1739 = vmul.f32 %v1703, 1.442695
    %v1740 = vpow.pop %v1739
    %v1741 = vmul.f32 %v1704, 1.442695
    %v1742 = vpow.pop %v1741
    %v1743 = vmul.f32 %v1705, 1.442695
    %v1744 = vpow.pop %v1743
    %v1745 = vmul.f32 %v1706, 1.442695
    %v1746 = vpow.pop %v1745
    %v1747 = vmul.f32 %v1707, 1.442695
    %v1748 = vpow.pop %v1747
    %v1749 = vmul.f32 %v1708, 1.442695
    %v1750 = vpow.pop %v1749
    %v1751 = vmul.f32 %v1709, 1.442695
    %v1752 = vpow.pop %v1751
    %v1753 = vmul.f32 %v1710, 1.442695
    %v1754 = vpow.pop %v1753
    %vm1755 = vcmp.ge.f32.partialorder %v1645, 0.0
    %vm1756 = vcmp.ge.f32.partialorder %v1646, 0.0
    %vm1757 = vcmp.ge.f32.partialorder %v1647, 0.0
    %vm1758 = vcmp.ge.f32.partialorder %v1648, 0.0
    %vm1759 = vcmp.ge.f32.partialorder %v1649, 0.0
    %vm1760 = vcmp.ge.f32.partialorder %v1650, 0.0
    %vm1761 = vcmp.ge.f32.partialorder %v1651, 0.0
    %vm1762 = vcmp.ge.f32.partialorder %v1652, 0.0
    %vm1763 = vcmp.ge.f32.partialorder %v1653, 0.0
    %vm1764 = vcmp.ge.f32.partialorder %v1654, 0.0
    %vm1765 = vcmp.ge.f32.partialorder %v1655, 0.0
    %vm1766 = vcmp.ge.f32.partialorder %v1656, 0.0
    %vm1767 = vcmp.ge.f32.partialorder %v1657, 0.0
    %vm1768 = vcmp.ge.f32.partialorder %v1658, 0.0
    %vm1769 = vcmp.ge.f32.partialorder %v1659, 0.0
    %vm1770 = vcmp.ge.f32.partialorder %v1660, 0.0
    %vm1771 = vcmp.ge.f32.partialorder %v1661, 0.0
    %vm1772 = vcmp.ge.f32.partialorder %v1662, 0.0
    %vm1773 = vcmp.ge.f32.partialorder %v1663, 0.0
    %vm1774 = vcmp.ge.f32.partialorder %v1664, 0.0
    %vm1775 = vcmp.ge.f32.partialorder %v1665, 0.0
    %vm1776 = vcmp.ge.f32.partialorder %v1666, 0.0
    %v1777 = vmul.f32 %v1712, 2.0
    %v1778 = vmul.f32 %v1714, 2.0
    %v1779 = vmul.f32 %v1716, 2.0
    %v1780 = vmul.f32 %v1718, 2.0
    %v1781 = vmul.f32 %v1720, 2.0
    %v1782 = vmul.f32 %v1722, 2.0
    %v1783 = vmul.f32 %v1724, 2.0
    %v1784 = vmul.f32 %v1726, 2.0
    %v1785 = vmul.f32 %v1728, 2.0
    %v1786 = vmul.f32 %v1730, 2.0
    %v1787 = vmul.f32 %v1732, 2.0
    %v1788 = vmul.f32 %v1734, 2.0
    %v1789 = vmul.f32 %v1736, 2.0
    %v1790 = vmul.f32 %v1738, 2.0
    %v1791 = vmul.f32 %v1740, 2.0
    %v1792 = vmul.f32 %v1742, 2.0
    %v1793 = vmul.f32 %v1744, 2.0
    %v1794 = vmul.f32 %v1746, 2.0
    %v1795 = vmul.f32 %v1748, 2.0
    %v1796 = vmul.f32 %v1750, 2.0
    %v1797 = vmul.f32 %v1752, 2.0
    %v1798 = vmul.f32 %v1754, 2.0
    %v1799 = vadd.f32 %v1777, 1.0
    %v1800 = vadd.f32 %v1778, 1.0
    %v1801 = vadd.f32 %v1779, 1.0
    %v1802 = vadd.f32 %v1780, 1.0
    %v1803 = vadd.f32 %v1781, 1.0
    %v1804 = vadd.f32 %v1782, 1.0
    %v1805 = vadd.f32 %v1783, 1.0
    %v1806 = vadd.f32 %v1784, 1.0
    %v1807 = vadd.f32 %v1785, 1.0
    %v1808 = vadd.f32 %v1786, 1.0
    %v1809 = vadd.f32 %v1787, 1.0
    %v1810 = vadd.f32 %v1788, 1.0
    %v1811 = vadd.f32 %v1789, 1.0
    %v1812 = vadd.f32 %v1790, 1.0
    %v1813 = vadd.f32 %v1791, 1.0
    %v1814 = vadd.f32 %v1792, 1.0
    %v1815 = vadd.f32 %v1793, 1.0
    %v1816 = vadd.f32 %v1794, 1.0
    %v1817 = vadd.f32 %v1795, 1.0
    %v1818 = vadd.f32 %v1796, 1.0
    %v1819 = vadd.f32 %v1797, 1.0
    %v1820 = vadd.f32 %v1798, 1.0
    %v1821 = vadd.f32 %v1712, 2.0
    %v1822 = vadd.f32 %v1714, 2.0
    %v1823 = vadd.f32 %v1716, 2.0
    %v1824 = vadd.f32 %v1718, 2.0
    %v1825 = vadd.f32 %v1720, 2.0
    %v1826 = vadd.f32 %v1722, 2.0
    %v1827 = vadd.f32 %v1724, 2.0
    %v1828 = vadd.f32 %v1726, 2.0
    %v1829 = vadd.f32 %v1728, 2.0
    %v1830 = vadd.f32 %v1730, 2.0
    %v1831 = vadd.f32 %v1732, 2.0
    %v1832 = vadd.f32 %v1734, 2.0
    %v1833 = vadd.f32 %v1736, 2.0
    %v1834 = vadd.f32 %v1738, 2.0
    %v1835 = vadd.f32 %v1740, 2.0
    %v1836 = vadd.f32 %v1742, 2.0
    %v1837 = vadd.f32 %v1744, 2.0
    %v1838 = vadd.f32 %v1746, 2.0
    %v1839 = vadd.f32 %v1748, 2.0
    %v1840 = vadd.f32 %v1750, 2.0
    %v1841 = vadd.f32 %v1752, 2.0
    %v1842 = vadd.f32 %v1754, 2.0
    %v1843 = vmul.f32 %v1712, %v1821
    %v1844 = vmul.f32 %v1714, %v1822
    %v1845 = vmul.f32 %v1716, %v1823
    %v1846 = vmul.f32 %v1718, %v1824
    %v1847 = vmul.f32 %v1720, %v1825
    %v1848 = vmul.f32 %v1722, %v1826
    %v1849 = vmul.f32 %v1724, %v1827
    %v1850 = vmul.f32 %v1726, %v1828
    %v1851 = vmul.f32 %v1728, %v1829
    %v1852 = vmul.f32 %v1730, %v1830
    %v1853 = vmul.f32 %v1732, %v1831
    %v1854 = vmul.f32 %v1734, %v1832
    %v1855 = vmul.f32 %v1736, %v1833
    %v1856 = vmul.f32 %v1738, %v1834
    %v1857 = vmul.f32 %v1740, %v1835
    %v1858 = vmul.f32 %v1742, %v1836
    %v1859 = vmul.f32 %v1744, %v1837
    %v1860 = vmul.f32 %v1746, %v1838
    %v1861 = vmul.f32 %v1748, %v1839
    %v1862 = vmul.f32 %v1750, %v1840
    %v1863 = vmul.f32 %v1752, %v1841
    %v1864 = vmul.f32 %v1754, %v1842
    %v1865 = vsel %vm1755, %v1799, %v1843
    %v1866 = vsel %vm1756, %v1800, %v1844
    %v1867 = vsel %vm1757, %v1801, %v1845
    %v1868 = vsel %vm1758, %v1802, %v1846
    %v1869 = vsel %vm1759, %v1803, %v1847
    %v1870 = vsel %vm1760, %v1804, %v1848
    %v1871 = vsel %vm1761, %v1805, %v1849
    %v1872 = vsel %vm1762, %v1806, %v1850
    %v1873 = vsel %vm1763, %v1807, %v1851
    %v1874 = vsel %vm1764, %v1808, %v1852
    %v1875 = vsel %vm1765, %v1809, %v1853
    %v1876 = vsel %vm1766, %v1810, %v1854
    %v1877 = vsel %vm1767, %v1811, %v1855
    %v1878 = vsel %vm1768, %v1812, %v1856
    %v1879 = vsel %vm1769, %v1813, %v1857
    %v1880 = vsel %vm1770, %v1814, %v1858
    %v1881 = vsel %vm1771, %v1815, %v1859
    %v1882 = vsel %vm1772, %v1816, %v1860
    %v1883 = vsel %vm1773, %v1817, %v1861
    %v1884 = vsel %vm1774, %v1818, %v1862
    %v1885 = vsel %vm1775, %v1819, %v1863
    %v1886 = vsel %vm1776, %v1820, %v1864
    %v1887 = vadd.f32 %v1712, 1.0
    %v1888 = vadd.f32 %v1714, 1.0
    %v1889 = vadd.f32 %v1716, 1.0
    %v1890 = vadd.f32 %v1718, 1.0
    %v1891 = vadd.f32 %v1720, 1.0
    %v1892 = vadd.f32 %v1722, 1.0
    %v1893 = vadd.f32 %v1724, 1.0
    %v1894 = vadd.f32 %v1726, 1.0
    %v1895 = vadd.f32 %v1728, 1.0
    %v1896 = vadd.f32 %v1730, 1.0
    %v1897 = vadd.f32 %v1732, 1.0
    %v1898 = vadd.f32 %v1734, 1.0
    %v1899 = vadd.f32 %v1736, 1.0
    %v1900 = vadd.f32 %v1738, 1.0
    %v1901 = vadd.f32 %v1740, 1.0
    %v1902 = vadd.f32 %v1742, 1.0
    %v1903 = vadd.f32 %v1744, 1.0
    %v1904 = vadd.f32 %v1746, 1.0
    %v1905 = vadd.f32 %v1748, 1.0
    %v1906 = vadd.f32 %v1750, 1.0
    %v1907 = vadd.f32 %v1752, 1.0
    %v1908 = vadd.f32 %v1754, 1.0
    %v1909 = vmul.f32 %v1777, %v1887
    %v1910 = vmul.f32 %v1778, %v1888
    %v1911 = vmul.f32 %v1779, %v1889
    %v1912 = vmul.f32 %v1780, %v1890
    %v1913 = vmul.f32 %v1781, %v1891
    %v1914 = vmul.f32 %v1782, %v1892
    %v1915 = vmul.f32 %v1783, %v1893
    %v1916 = vmul.f32 %v1784, %v1894
    %v1917 = vmul.f32 %v1785, %v1895
    %v1918 = vmul.f32 %v1786, %v1896
    %v1919 = vmul.f32 %v1787, %v1897
    %v1920 = vmul.f32 %v1788, %v1898
    %v1921 = vmul.f32 %v1789, %v1899
    %v1922 = vmul.f32 %v1790, %v1900
    %v1923 = vmul.f32 %v1791, %v1901
    %v1924 = vmul.f32 %v1792, %v1902
    %v1925 = vmul.f32 %v1793, %v1903
    %v1926 = vmul.f32 %v1794, %v1904
    %v1927 = vmul.f32 %v1795, %v1905
    %v1928 = vmul.f32 %v1796, %v1906
    %v1929 = vmul.f32 %v1797, %v1907
    %v1930 = vmul.f32 %v1798, %v1908
    %v1931 = vadd.f32 %v1909, 1.0
    %v1932 = vadd.f32 %v1910, 1.0
    %v1933 = vadd.f32 %v1911, 1.0
    %v1934 = vadd.f32 %v1912, 1.0
    %v1935 = vadd.f32 %v1913, 1.0
    %v1936 = vadd.f32 %v1914, 1.0
    %v1937 = vadd.f32 %v1915, 1.0
    %v1938 = vadd.f32 %v1916, 1.0
    %v1939 = vadd.f32 %v1917, 1.0
    %v1940 = vadd.f32 %v1918, 1.0
    %v1941 = vadd.f32 %v1919, 1.0
    %v1942 = vadd.f32 %v1920, 1.0
    %v1943 = vadd.f32 %v1921, 1.0
    %v1944 = vadd.f32 %v1922, 1.0
    %v1945 = vadd.f32 %v1923, 1.0
    %v1946 = vadd.f32 %v1924, 1.0
    %v1947 = vadd.f32 %v1925, 1.0
    %v1948 = vadd.f32 %v1926, 1.0
    %v1949 = vadd.f32 %v1927, 1.0
    %v1950 = vadd.f32 %v1928, 1.0
    %v1951 = vadd.f32 %v1929, 1.0
    %v1952 = vadd.f32 %v1930, 1.0
    %v1953 = vadd.f32 %v1843, 2.0
    %v1954 = vadd.f32 %v1844, 2.0
    %v1955 = vadd.f32 %v1845, 2.0
    %v1956 = vadd.f32 %v1846, 2.0
    %v1957 = vadd.f32 %v1847, 2.0
    %v1958 = vadd.f32 %v1848, 2.0
    %v1959 = vadd.f32 %v1849, 2.0
    %v1960 = vadd.f32 %v1850, 2.0
    %v1961 = vadd.f32 %v1851, 2.0
    %v1962 = vadd.f32 %v1852, 2.0
    %v1963 = vadd.f32 %v1853, 2.0
    %v1964 = vadd.f32 %v1854, 2.0
    %v1965 = vadd.f32 %v1855, 2.0
    %v1966 = vadd.f32 %v1856, 2.0
    %v1967 = vadd.f32 %v1857, 2.0
    %v1968 = vadd.f32 %v1858, 2.0
    %v1969 = vadd.f32 %v1859, 2.0
    %v1970 = vadd.f32 %v1860, 2.0
    %v1971 = vadd.f32 %v1861, 2.0
    %v1972 = vadd.f32 %v1862, 2.0
    %v1973 = vadd.f32 %v1863, 2.0
    %v1974 = vadd.f32 %v1864, 2.0
    %v1975 = vsel %vm1755, %v1931, %v1953
    %v1976 = vsel %vm1756, %v1932, %v1954
    %v1977 = vsel %vm1757, %v1933, %v1955
    %v1978 = vsel %vm1758, %v1934, %v1956
    %v1979 = vsel %vm1759, %v1935, %v1957
    %v1980 = vsel %vm1760, %v1936, %v1958
    %v1981 = vsel %vm1761, %v1937, %v1959
    %v1982 = vsel %vm1762, %v1938, %v1960
    %v1983 = vsel %vm1763, %v1939, %v1961
    %v1984 = vsel %vm1764, %v1940, %v1962
    %v1985 = vsel %vm1765, %v1941, %v1963
    %v1986 = vsel %vm1766, %v1942, %v1964
    %v1987 = vsel %vm1767, %v1943, %v1965
    %v1988 = vsel %vm1768, %v1944, %v1966
    %v1989 = vsel %vm1769, %v1945, %v1967
    %v1990 = vsel %vm1770, %v1946, %v1968
    %v1991 = vsel %vm1771, %v1947, %v1969
    %v1992 = vsel %vm1772, %v1948, %v1970
    %v1993 = vsel %vm1773, %v1949, %v1971
    %v1994 = vsel %vm1774, %v1950, %v1972
    %v1995 = vsel %vm1775, %v1951, %v1973
    %v1996 = vsel %vm1776, %v1952, %v1974
    %v1997 = vmul.f32 %v1645, %v1865
    %v1998 = vmul.f32 %v1646, %v1866
    %v1999 = vmul.f32 %v1647, %v1867
    %v2000 = vmul.f32 %v1648, %v1868
    %v2001 = vmul.f32 %v1649, %v1869
    %v2002 = vmul.f32 %v1650, %v1870
    %v2003 = vmul.f32 %v1651, %v1871
    %v2004 = vmul.f32 %v1652, %v1872
    %v2005 = vmul.f32 %v1653, %v1873
    %v2006 = vmul.f32 %v1654, %v1874
    %v2007 = vmul.f32 %v1655, %v1875
    %v2008 = vmul.f32 %v1656, %v1876
    %v2009 = vmul.f32 %v1657, %v1877
    %v2010 = vmul.f32 %v1658, %v1878
    %v2011 = vmul.f32 %v1659, %v1879
    %v2012 = vmul.f32 %v1660, %v1880
    %v2013 = vmul.f32 %v1661, %v1881
    %v2014 = vmul.f32 %v1662, %v1882
    %v2015 = vmul.f32 %v1663, %v1883
    %v2016 = vmul.f32 %v1664, %v1884
    %v2017 = vmul.f32 %v1665, %v1885
    %v2018 = vmul.f32 %v1666, %v1886
    %v2019 = vrcp.pop %v1975
    %v2020 = vrcp.pop %v1976
    %v2021 = vrcp.pop %v1977
    %v2022 = vrcp.pop %v1978
    %v2023 = vrcp.pop %v1979
    %v2024 = vrcp.pop %v1980
    %v2025 = vrcp.pop %v1981
    %v2026 = vrcp.pop %v1982
    %v2027 = vrcp.pop %v1983
    %v2028 = vrcp.pop %v1984
    %v2029 = vrcp.pop %v1985
    %v2030 = vrcp.pop %v1986
    %v2031 = vrcp.pop %v1987
    %v2032 = vrcp.pop %v1988
    %v2033 = vrcp.pop %v1989
    %v2034 = vrcp.pop %v1990
    %v2035 = vrcp.pop %v1991
    %v2036 = vrcp.pop %v1992
    %v2037 = vrcp.pop %v1993
    %v2038 = vrcp.pop %v1994
    %v2039 = vrcp.pop %v1995
    %v2040 = vrcp.pop %v1996
    %v2041 = vmul.f32 %v1997, %v2019
    %v2042 = vmul.f32 %v1998, %v2020
    %v2043 = vmul.f32 %v1999, %v2021
    %v2044 = vmul.f32 %v2000, %v2022
    %v2045 = vmul.f32 %v2001, %v2023
    %v2046 = vmul.f32 %v2002, %v2024
    %v2047 = vmul.f32 %v2003, %v2025
    %v2048 = vmul.f32 %v2004, %v2026
    %v2049 = vmul.f32 %v2005, %v2027
    %v2050 = vmul.f32 %v2006, %v2028
    %v2051 = vmul.f32 %v2007, %v2029
    %v2052 = vmul.f32 %v2008, %v2030
    %v2053 = vmul.f32 %v2009, %v2031
    %v2054 = vmul.f32 %v2010, %v2032
    %v2055 = vmul.f32 %v2011, %v2033
    %v2056 = vmul.f32 %v2012, %v2034
    %v2057 = vmul.f32 %v2013, %v2035
    %v2058 = vmul.f32 %v2014, %v2036
    %v2059 = vmul.f32 %v2015, %v2037
    %v2060 = vmul.f32 %v2016, %v2038
    %v2061 = vmul.f32 %v2017, %v2039
    %v2062 = vmul.f32 %v2018, %v2040
    %v2063 = vlaneseq
    %v2064 = vshrl.u32 %v2063, 7
    %v2065 = vadd.s32 %v2064, 8
    %v2066 = vld [vmem:[%s3] sm:$0x1]
    %v2067 = vlaneseq
    %v2068 = vshrl.u32 %v2067, 7
    %v2069 = vsub.s32 0, %v2068
    %v2070 = vrot.slane %v2066, %v2069
    %vm2071 = vcmp.lt.s32.totalorder %v2064, %v2070
    %vm2072 = vcmp.lt.s32.totalorder %v2065, %v2070
    %v2095 = vcombine.low %v2041, %v2042
    %v2096 = vcombine.low %v2043, %v2044
    %v2097 = vcombine.low %v2045, %v2046
    %v2098 = vcombine.low %v2047, %v2048
    %v2100 = vunpack.c.l.s4 1966171168
    %v2101 = vunpack.c.0.s8 %v2100
    %v2102 = vlaneseq
    %v2103 = vshrl.u32 %v2102, 7
    %v2104 = vsub.s32 %v2101, %v2103
    %v2105 = vrot.slane %v2095, %v2104
    %v2107 = vunpack.c.l.s4 1966171168
    %v2108 = vunpack.c.0.s8 %v2107
    %v2109 = vlaneseq
    %v2110 = vshrl.u32 %v2109, 7
    %v2111 = vsub.s32 %v2108, %v2110
    %v2112 = vrot.slane %v2096, %v2111
    %v2114 = vunpack.c.l.s4 1966171168
    %v2115 = vunpack.c.0.s8 %v2114
    %v2116 = vlaneseq
    %v2117 = vshrl.u32 %v2116, 7
    %v2118 = vsub.s32 %v2115, %v2117
    %v2119 = vrot.slane %v2097, %v2118
    %v2121 = vunpack.c.l.s4 1966171168
    %v2122 = vunpack.c.0.s8 %v2121
    %v2123 = vlaneseq
    %v2124 = vshrl.u32 %v2123, 7
    %v2125 = vsub.s32 %v2122, %v2124
    %v2126 = vrot.slane %v2098, %v2125
    %v2127 = vcombine.low %v2105, %v2112
    %v2128 = vcombine.low %v2119, %v2126
    %v2130 = vunpack.c.l.s4 1966171168
    %v2131 = vunpack.c.0.s8 %v2130
    %v2132 = vlaneseq
    %v2133 = vshrl.u32 %v2132, 7
    %v2134 = vsub.s32 %v2131, %v2133
    %v2135 = vrot.slane %v2127, %v2134
    %v2137 = vunpack.c.l.s4 1966171168
    %v2138 = vunpack.c.0.s8 %v2137
    %v2139 = vlaneseq
    %v2140 = vshrl.u32 %v2139, 7
    %v2141 = vsub.s32 %v2138, %v2140
    %v2142 = vrot.slane %v2128, %v2141
    %v2143 = vcombine.low %v2135, %v2142
    %v2144 = vcombine.low %v2049, %v2050
    %v2146 = vunpack.c.l.s4 1966171168
    %v2147 = vunpack.c.0.s8 %v2146
    %v2148 = vlaneseq
    %v2149 = vshrl.u32 %v2148, 7
    %v2150 = vsub.s32 %v2147, %v2149
    %v2151 = vrot.slane %v2144, %v2150
    %v2153 = vunpack.c.l.s4 1966171168
    %v2154 = vunpack.c.0.s8 %v2153
    %v2155 = vlaneseq
    %v2156 = vshrl.u32 %v2155, 7
    %v2157 = vsub.s32 %v2154, %v2156
    %v2158 = vrot.slane %v2051, %v2157
    %v2159 = vcombine.low %v2151, %v2158
    %v2161 = vunpack.c.l.s4 1966171168
    %v2162 = vunpack.c.0.s8 %v2161
    %v2163 = vlaneseq
    %v2164 = vshrl.u32 %v2163, 7
    %v2165 = vsub.s32 %v2162, %v2164
    %v2166 = vrot.slane %v2159, %v2165
    %v2167 = vcombine.low %v2052, %v2053
    %v2168 = vcombine.low %v2054, %v2055
    %v2169 = vcombine.low %v2056, %v2057
    %v2170 = vcombine.low %v2058, %v2059
    %v2172 = vunpack.c.l.s4 1966171168
    %v2173 = vunpack.c.0.s8 %v2172
    %v2174 = vlaneseq
    %v2175 = vshrl.u32 %v2174, 7
    %v2176 = vsub.s32 %v2173, %v2175
    %v2177 = vrot.slane %v2167, %v2176
    %v2179 = vunpack.c.l.s4 1966171168
    %v2180 = vunpack.c.0.s8 %v2179
    %v2181 = vlaneseq
    %v2182 = vshrl.u32 %v2181, 7
    %v2183 = vsub.s32 %v2180, %v2182
    %v2184 = vrot.slane %v2168, %v2183
    %v2186 = vunpack.c.l.s4 1966171168
    %v2187 = vunpack.c.0.s8 %v2186
    %v2188 = vlaneseq
    %v2189 = vshrl.u32 %v2188, 7
    %v2190 = vsub.s32 %v2187, %v2189
    %v2191 = vrot.slane %v2169, %v2190
    %v2193 = vunpack.c.l.s4 1966171168
    %v2194 = vunpack.c.0.s8 %v2193
    %v2195 = vlaneseq
    %v2196 = vshrl.u32 %v2195, 7
    %v2197 = vsub.s32 %v2194, %v2196
    %v2198 = vrot.slane %v2170, %v2197
    %v2199 = vcombine.low %v2177, %v2184
    %v2200 = vcombine.low %v2191, %v2198
    %v2202 = vunpack.c.l.s4 1966171168
    %v2203 = vunpack.c.0.s8 %v2202
    %v2204 = vlaneseq
    %v2205 = vshrl.u32 %v2204, 7
    %v2206 = vsub.s32 %v2203, %v2205
    %v2207 = vrot.slane %v2199, %v2206
    %v2209 = vunpack.c.l.s4 1966171168
    %v2210 = vunpack.c.0.s8 %v2209
    %v2211 = vlaneseq
    %v2212 = vshrl.u32 %v2211, 7
    %v2213 = vsub.s32 %v2210, %v2212
    %v2214 = vrot.slane %v2200, %v2213
    %v2215 = vcombine.low %v2207, %v2214
    %v2216 = vcombine.low %v2060, %v2061
    %v2218 = vunpack.c.l.s4 1966171168
    %v2219 = vunpack.c.0.s8 %v2218
    %v2220 = vlaneseq
    %v2221 = vshrl.u32 %v2220, 7
    %v2222 = vsub.s32 %v2219, %v2221
    %v2223 = vrot.slane %v2216, %v2222
    %v2225 = vunpack.c.l.s4 1966171168
    %v2226 = vunpack.c.0.s8 %v2225
    %v2227 = vlaneseq
    %v2228 = vshrl.u32 %v2227, 7
    %v2229 = vsub.s32 %v2226, %v2228
    %v2230 = vrot.slane %v2062, %v2229
    %v2231 = vcombine.low %v2223, %v2230
    %v2233 = vunpack.c.l.s4 1966171168
    %v2234 = vunpack.c.0.s8 %v2233
    %v2235 = vlaneseq
    %v2236 = vshrl.u32 %v2235, 7
    %v2237 = vsub.s32 %v2234, %v2236
    %v2238 = vrot.slane %v2231, %v2237
    %v2243 = vsel %vm2071, %v2143, -3.4028235e+38
    %v2244 = vsel %vm2072, %v2166, -3.4028235e+38
    %v2245 = vsel %vm2071, %v2215, -3.4028235e+38
    %v2246 = vsel %vm2072, %v2238, -3.4028235e+38
    %vm2247 = vcmask 1042432
    %v2248 = vsel %vm2247, %v2244, -inf
    %v2249 = vmax.f32 %v2243, %v2248
    %v2250 = vrot.slane %v2249, 4
    %v2251 = vmax.f32 %v2249, %v2250
    %v2252 = vrot.slane %v2251, 2
    %v2253 = vmax.f32 %v2251, %v2252
    %v2254 = vrot.slane %v2253, 1
    %v2255 = vmax.f32 %v2253, %v2254
    %v2256 = vsel %vm2247, %v2246, -inf
    %v2257 = vmax.f32 %v2245, %v2256
    %v2258 = vrot.slane %v2257, 4
    %v2259 = vmax.f32 %v2257, %v2258
    %v2260 = vrot.slane %v2259, 2
    %v2261 = vmax.f32 %v2259, %v2260
    %v2262 = vrot.slane %v2261, 1
    %v2263 = vmax.f32 %v2261, %v2262
    %v2264 = vld [vmem:[%s4] sm:$0xff]
    %v2265 = vld [vmem:[%s4 + $0x8] sm:$0xff]
    %v2266 = vld [vmem:[%s4 + $0x10] sm:$0xff]
    %v2267 = vld [vmem:[%s4 + $0x18] sm:$0xff]
    %v2268 = vld [vmem:[%s4 + $0x20] sm:$0xff]
    %v2269 = vld [vmem:[%s4 + $0x28] sm:$0xff]
    %v2270 = vld [vmem:[%s4 + $0x30] sm:$0xff]
    %v2271 = vld [vmem:[%s4 + $0x38] sm:$0xff]
    %v2272 = vld [vmem:[%s4 + $0x40] sm:$0xff]
    %v2273 = vld [vmem:[%s4 + $0x48] sm:$0xff]
    %v2274 = vld [vmem:[%s4 + $0x50] sm:$0xff]
    %v2275 = vld [vmem:[%s4 + $0x58] sm:$0xff]
    %v2276 = vld [vmem:[%s4 + $0x60] sm:$0xff]
    %v2277 = vld [vmem:[%s4 + $0x68] sm:$0xff]
    %v2278 = vld [vmem:[%s4 + $0x70] sm:$0xff]
    %v2279 = vld [vmem:[%s4 + $0x78] sm:$0xff]
    %v2280 = vld [vmem:[%s5] sm:$0x1]
    %v2282 = vlaneseq
    %v2283 = vshrl.u32 %v2282, 7
    %v2284 = vsub.s32 0, %v2283
    %v2285 = vrot.slane %v2280, %v2284
    %vm2289 = vcmask 1041409
    %v2290 = vsel %vm2289, %v2263, %v2255
    %2292 = vmatprep.subr.mxu0 0.0
    %2293 = vmatpush1.msra.mxu0 %v2264
    %2294 = vmatprep.subr.mxu0 0.0
    %2295 = vmatpush1.msra.mxu0 %v2265
    %2296 = vmatprep.subr.mxu0 0.0
    %2297 = vmatpush1.msra.mxu0 %v2266
    %2298 = vmatprep.subr.mxu0 0.0
    %2299 = vmatpush1.msra.mxu0 %v2267
    %2300 = vmatprep.subr.mxu0 0.0
    %2301 = vmatpush1.msra.mxu0 %v2268
    %2302 = vmatprep.subr.mxu0 0.0
    %2303 = vmatpush1.msra.mxu0 %v2269
    %2304 = vmatprep.subr.mxu0 0.0
    %2305 = vmatpush1.msra.mxu0 %v2270
    %2306 = vmatprep.subr.mxu0 0.0
    %2307 = vmatpush1.msra.mxu0 %v2271
    %2308 = vmatprep.subr.mxu0 0.0
    %2309 = vmatpush1.msra.mxu0 %v2272
    %2310 = vmatprep.subr.mxu0 0.0
    %2311 = vmatpush1.msra.mxu0 %v2273
    %2312 = vmatprep.subr.mxu0 0.0
    %2313 = vmatpush1.msra.mxu0 %v2274
    %2314 = vmatprep.subr.mxu0 0.0
    %2315 = vmatpush1.msra.mxu0 %v2275
    %2316 = vmatprep.subr.mxu0 0.0
    %2317 = vmatpush1.msra.mxu0 %v2276
    %2318 = vmatprep.subr.mxu0 0.0
    %2319 = vmatpush1.msra.mxu0 %v2277
    %2320 = vmatprep.subr.mxu0 0.0
    %2321 = vmatpush1.msra.mxu0 %v2278
    %2322 = vmatprep.subr.mxu0 0.0
    %2323 = vmatpush1.msra.mxu0 %v2279
    %2324 = vmatprep.subr.mxu0 0.0
    %2325 = vmatpush1.msra.mxu0 0.0
    %2326 = vmatprep.subr.mxu0 0.0
    %2327 = vmatpush1.msra.mxu0 0.0
    %2328 = vmatprep.subr.mxu0 0.0
    %2329 = vmatpush1.msra.mxu0 0.0
    %2330 = vmatprep.subr.mxu0 0.0
    %2331 = vmatpush1.msra.mxu0 0.0
    %2332 = vmatprep.subr.mxu0 0.0
    %2333 = vmatpush1.msra.mxu0 0.0
    %2334 = vmatprep.subr.mxu0 0.0
    %2335 = vmatpush1.msra.mxu0 0.0
    %2336 = vmatprep.subr.mxu0 0.0
    %2337 = vmatpush1.msra.mxu0 0.0
    %2338 = vmatprep.subr.mxu0 0.0
    %2339 = vmatpush1.msra.mxu0 0.0
    %2340 = vmatprep.subr.mxu0 0.0
    %2341 = vmatpush1.msra.mxu0 0.0
    %2342 = vmatprep.subr.mxu0 0.0
    %2343 = vmatpush1.msra.mxu0 0.0
    %2344 = vmatprep.subr.mxu0 0.0
    %2345 = vmatpush1.msra.mxu0 0.0
    %2346 = vmatprep.subr.mxu0 0.0
    %2347 = vmatpush1.msra.mxu0 0.0
    %2348 = vmatprep.subr.mxu0 0.0
    %2349 = vmatpush1.msra.mxu0 0.0
    %2350 = vmatprep.subr.mxu0 0.0
    %2351 = vmatpush1.msra.mxu0 0.0
    %2352 = vmatprep.subr.mxu0 0.0
    %2353 = vmatpush1.msra.mxu0 0.0
    %2354 = vmatprep.subr.mxu0 0.0
    %2355 = vmatpush1.msra.mxu0 0.0
    %2356 = vmatprep.mubr.f32.mxu0 0.0
    %2357 = vmatmul.mubr.f32.gmra.mrb[0].mxu0 %v2290
    %v2358 = vpop.f32.mrb[0].mxu0
    %v2359 = vadd.f32 %v2285, %v2358
    %v2360 = vpop.f32.mrb[0].mxu0
    %2361 = vdwg.mxu0
    %vm2362 = vcmask 9216
    %2363 = vst.msk [vmem:[#allocation2] sm:$0x3] %vm2362, %v2359
    // Predicated region
    $region26: #{textcnn_bn_forward.1} parent=1 // pred_check
      _
    $region27: #{textcnn_bn_forward.1} parent=1 // pred_check_branch
      %2365 = sbr.rel (0) target = $region29
    $region28: #{textcnn_bn_forward.1} parent=1 // pred_region
      %s2367 = ssub.s32 32, 32
      %2368 = vsyncadd [#allocation3], %s2367
      %s2370 = sshll.u32 [#allocation2], 4
      %s2371 = int_to_ptr.vmem [resolvable:$true] %s2370
      %2373 = dma.vmem_to_hbm [thread:$0]  %s2371, 32, %s6, [#allocation3]
    $region29: #{textcnn_bn_forward.1} parent=1 // pred_fallthru
      _
    // Predicated region
    $region30: #{textcnn_bn_forward.1} parent=1 // pred_check
      _
    $region31: #{textcnn_bn_forward.1} parent=1 // pred_check_branch
      %2375 = sbr.rel (0) target = $region33
    $region32: #{textcnn_bn_forward.1} parent=1 // pred_region
      %2376 = dma.done [#allocation3], 32
    $region33: #{textcnn_bn_forward.1} parent=1 // pred_fallthru
      _
    %2377 = vsyncpa [#allocation3], 1

</llo_original>
